<compile_context>
chip_gen: v6e
topology: v6e:2x2x1
jax: 0.10.0
libtpu: 0.0.40
codegen_flags: <defaults>
</compile_context>

<pallas_src>
import functools

import numpy as np

import jax
import jax.numpy as jnp
from jax import lax
from jax.experimental import pallas as pl
from jax.experimental.pallas import tpu as pltpu


# --------------------------------------------------------------------------
# Static network dimensions (LeNet on 28x28x1 input; fc1 = 16*4*4 forces 28)
# --------------------------------------------------------------------------
B = 2                       # batch
H_IN = 28                   # input spatial
K = 5                       # conv kernel
C1, C2 = 6, 16              # conv out channels
H1 = H_IN - K + 1           # 24  (conv1 out)
P1H = H1 // 2               # 12  (pool1 out)
H2 = P1H - K + 1            # 8   (conv2 out)
P2H = H2 // 2               # 4   (pool2 out)
FC_IN = C2 * P2H * P2H      # 256
N1, N2, N3 = 120, 84, 10

A1_W = C1 * H1              # 144  (conv1 lane width: o*24 + x)
A2_W = C2 * H2              # 128  (conv2 lane width: o*8  + x)

# ---- packed slab A layout (conv1 Toeplitz blocks + bias), width 144 -------
T1_BLK = 32                       # rows reserved per dy block (28 used)
B1_ROW = K * T1_BLK               # 160
ROWS_A = B1_ROW + 8               # 168

# ---- packed slab B layout, width 128 ---------------------------------------
SRE1_ROWS = P1H * B               # 24   pool1 row-compaction picker
SRE1_COLS = H1 * B - B            # 46   (= rows of pool1's row-maxed slab)
T2_OFF = SRE1_ROWS                # 24
T2_ROWS = C1 * H1 - 1             # 143  (un-compacted pool1 lane width)
T2_BLK = 144                      # rows reserved per conv2 dy block
B2_ROW = T2_OFF + K * T2_BLK      # 744
WF1_OFF = B2_ROW + 8              # 752
WF1_ROWS = A2_W - 1               # 127  (un-compacted pool2 lane width)
WF1_BLK = 128
BF1_ROW = WF1_OFF + P2H * WF1_BLK  # 1264
WF2_OFF = BF1_ROW + 8             # 1272
BF2_ROW = WF2_OFF + 128           # 1400
WF3_OFF = BF2_ROW + 8             # 1408
BF3_ROW = WF3_OFF + 128           # 1536
ROWS_B = BF3_ROW + 8              # 1544


# --------------------------------------------------------------------------
# The megakernel: whole batched forward pass in one pallas_call
# --------------------------------------------------------------------------
def _lenet_kernel(x_ref, wa_ref, wb_ref, out_ref):
    f32, bf16 = jnp.float32, jnp.bfloat16
    dot = functools.partial(jnp.dot, preferred_element_type=f32)

    # ===== conv1: split-K over the 5 kernel rows (batched over sublanes) ====
    # x rows are (y*B + b); slice [dy*B : dy*B + H1*B] -> rows (y+dy)*B + b.
    xb = x_ref[...].astype(bf16)                                    # [56, 28]
    acc = dot(xb[0:H1 * B, :], wa_ref[pl.ds(0, H_IN), :])           # [48, 144]
    for dy in range(1, K):
        acc = acc + dot(xb[dy * B:dy * B + H1 * B, :],
                        wa_ref[pl.ds(dy * T1_BLK, H_IN), :])
    a1 = jnp.maximum(acc + wa_ref[pl.ds(B1_ROW, 1), :].astype(f32), 0.0)

    # ===== pool1: 2x2 max via shifted-slice maxima (no selection matmuls) ===
    # then ONE 0/1 matmul compacts the even pooled rows for conv2's slices.
    r1 = jnp.maximum(a1[:-B, :], a1[B:, :])                         # [46, 144]
    c1 = jnp.maximum(r1[:, :-1], r1[:, 1:])                         # [46, 143]
    sre1 = wb_ref[pl.ds(0, SRE1_ROWS), pl.ds(0, SRE1_COLS)]         # [24, 46]
    p1 = dot(sre1, c1.astype(bf16)).astype(bf16)                    # [24, 143]

    # ===== conv2: split-K; pool1's even-column pick is folded into the ======
    # Toeplitz blocks (they only read lanes c*24 + 2*cin).
    acc = dot(p1[0:H2 * B, :], wb_ref[pl.ds(T2_OFF, T2_ROWS), :])   # [16, 128]
    for dy in range(1, K):
        acc = acc + dot(p1[dy * B:dy * B + H2 * B, :],
                        wb_ref[pl.ds(T2_OFF + dy * T2_BLK, T2_ROWS), :])
    a2 = jnp.maximum(acc + wb_ref[pl.ds(B2_ROW, 1), :].astype(f32), 0.0)

    # ===== pool2 + flatten + fc1: shifted-slice maxima; the even row/column =
    # selection AND torch.flatten(x,1) are folded into 4 accumulating fc1
    # matmuls (one per pooled row) -> zero data-movement matmuls here.
    r2 = jnp.maximum(a2[:-B, :], a2[B:, :])                         # [14, 128]
    c2 = jnp.maximum(r2[:, :-1], r2[:, 1:]).astype(bf16)            # [14, 127]
    acc = dot(c2[0:B, :], wb_ref[pl.ds(WF1_OFF, WF1_ROWS), :])      # [ 2, 128]
    for yp in range(1, P2H):
        acc = acc + dot(c2[2 * yp * B:2 * yp * B + B, :],
                        wb_ref[pl.ds(WF1_OFF + yp * WF1_BLK, WF1_ROWS), :])
    h = jnp.maximum(acc + wb_ref[pl.ds(BF1_ROW, 1), :].astype(f32), 0.0)

    # ===== fc2 / fc3 (lane widths zero-padded to 128 -> dense stores) =======
    h = jnp.maximum(dot(h.astype(bf16), wb_ref[pl.ds(WF2_OFF, 128), :])
                    + wb_ref[pl.ds(BF2_ROW, 1), :].astype(f32), 0.0)
    out = (dot(h.astype(bf16), wb_ref[pl.ds(WF3_OFF, 128), :])
           + wb_ref[pl.ds(BF3_ROW, 1), :].astype(f32))
    out_ref[...] = out.astype(out_ref.dtype)                        # [2, 128]


def _full_spec(shape):
    return pl.BlockSpec(shape, lambda i: (0,) * len(shape))


@jax.jit
def net_forward(kp, x_nchw):
    """x_nchw: [B, 1, 28, 28] float32 -> logits [B, 10]."""
    assert x_nchw.shape == (B, 1, H_IN, H_IN)
    # y-major / batch-minor interleave: row = y*B + b.  Lets every stage run
    # batched with contiguous row slices inside the kernel.
    x_yb = jnp.transpose(x_nchw[:, 0, :, :], (1, 0, 2)).reshape(H_IN * B, H_IN)
    args = (x_yb, kp["wa"], kp["wb"])
    out = pl.pallas_call(
        _lenet_kernel,
        out_shape=jax.ShapeDtypeStruct((B, 128), jnp.float32),
        grid=(1,),
        in_specs=[_full_spec(a.shape) for a in args],
        out_specs=_full_spec((B, 128)),
        compiler_params=pltpu.CompilerParams(
            dimension_semantics=("arbitrary",)),
    )(*args)
    return out[:, :N3]


# --------------------------------------------------------------------------
# One-time weight re-layout into two bf16 slabs (done at init, not per call)
# --------------------------------------------------------------------------
def prepare_kernel_params(params):
    w1 = np.asarray(params["conv1_w"], np.float32)        # [6,1,5,5]
    b1 = np.asarray(params["conv1_b"], np.float32)
    w2 = np.asarray(params["conv2_w"], np.float32)        # [16,6,5,5]
    b2 = np.asarray(params["conv2_b"], np.float32)
    f1w = np.asarray(params["fc1_w"], np.float32)         # [120,256]
    f1b = np.asarray(params["fc1_b"], np.float32)
    f2w = np.asarray(params["fc2_w"], np.float32)         # [84,120]
    f2b = np.asarray(params["fc2_b"], np.float32)
    f3w = np.asarray(params["fc3_w"], np.float32)         # [10,84]
    f3b = np.asarray(params["fc3_b"], np.float32)

    # --- slab A: conv1 split-K Toeplitz blocks (one per kernel row dy) ------
    # block[dy][x_in, o*H1 + x_out] = w1[o, 0, dy, x_in - x_out]
    wa = np.zeros((ROWS_A, A1_W), np.float32)
    for dy in range(K):
        for o in range(C1):
            for xo in range(H1):
                for dx in range(K):
                    wa[dy * T1_BLK + xo + dx, o * H1 + xo] = w1[o, 0, dy, dx]
    wa[B1_ROW, :] = np.repeat(b1, H1)

    # --- slab B -------------------------------------------------------------
    wb = np.zeros((ROWS_B, 128), np.float32)

    # pool1 row-compaction picker: output row r*B+b <- row-maxed row 2r*B+b.
    for r in range(P1H):
        for bb in range(B):
            wb[r * B + bb, 2 * r * B + bb] = 1.0

    # conv2 split-K Toeplitz blocks; contraction runs over the UN-compacted
    # pool1 lane layout (lane = c*H1 + 2*cin) -> pool1's even-column pick is
    # folded in (all other lanes map to zero rows).
    for dy in range(K):
        base = T2_OFF + dy * T2_BLK
        for o in range(C2):
            for c in range(C1):
                for xo in range(H2):
                    for dx in range(K):
                        wb[base + c * H1 + 2 * (xo + dx),
                           o * H2 + xo] = w2[o, c, dy, dx]
    wb[B2_ROW, :] = np.repeat(b2, H2)

    # fc1 as P2H accumulating blocks (one per pooled row yp); contraction runs
    # over the UN-compacted pool2 lane layout (lane = o*H2 + 2*xp), folding
    # pool2's even-column pick and torch.flatten(x, 1) into the weights.
    for yp in range(P2H):
        base = WF1_OFF + yp * WF1_BLK
        for o in range(C2):
            for xp in range(P2H):
                wb[base + o * H2 + 2 * xp, :N1] = \
                    f1w[:, o * P2H * P2H + yp * P2H + xp]
    wb[BF1_ROW, :N1] = f1b

    wb[WF2_OFF:WF2_OFF + N1, :N2] = f2w.T
    wb[BF2_ROW, :N2] = f2b
    wb[WF3_OFF:WF3_OFF + N2, :N3] = f3w.T
    wb[BF3_ROW, :N3] = f3b

    # bf16 matmul operands (single-pass MXU); accumulation stays f32 in-kernel.
    return {"wa": jnp.asarray(wa, jnp.bfloat16),
            "wb": jnp.asarray(wb, jnp.bfloat16)}


# --------------------------------------------------------------------------
# Deterministic PyTorch-style parameter init
# --------------------------------------------------------------------------
def init_params(key):
    def u(k, shape, fan_in):
        bound = 1.0 / np.sqrt(float(fan_in))
        return jax.random.uniform(k, shape, jnp.float32, -bound, bound)

    ks = jax.random.split(key, 10)
    return {
        "conv1_w": u(ks[0], (C1, 1, K, K), 1 * K * K),
        "conv1_b": u(ks[1], (C1,), 1 * K * K),
        "conv2_w": u(ks[2], (C2, C1, K, K), C1 * K * K),
        "conv2_b": u(ks[3], (C2,), C1 * K * K),
        "fc1_w": u(ks[4], (N1, FC_IN), FC_IN),   # PyTorch Linear: [out, in]
        "fc1_b": u(ks[5], (N1,), FC_IN),
        "fc2_w": u(ks[6], (N2, N1), N1),
        "fc2_b": u(ks[7], (N2,), N1),
        "fc3_w": u(ks[8], (N3, N2), N2),
        "fc3_b": u(ks[9], (N3,), N2),
    }


# --------------------------------------------------------------------------
# Pure-JAX reference (exact torch semantics, f32) for the correctness check
# --------------------------------------------------------------------------
def reference_forward(params, x):
    dn = ("NCHW", "OIHW", "NCHW")
    y = lax.conv_general_dilated(x, params["conv1_w"], (1, 1), "VALID",
                                 dimension_numbers=dn)
    y = jnp.maximum(y + params["conv1_b"][None, :, None, None], 0.0)
    y = lax.reduce_window(y, -jnp.inf, lax.max, (1, 1, 2, 2), (1, 1, 2, 2), "VALID")
    y = lax.conv_general_dilated(y, params["conv2_w"], (1, 1), "VALID",
                                 dimension_numbers=dn)
    y = jnp.maximum(y + params["conv2_b"][None, :, None, None], 0.0)
    y = lax.reduce_window(y, -jnp.inf, lax.max, (1, 1, 2, 2), (1, 1, 2, 2), "VALID")
    y = y.reshape(y.shape[0], -1)                           # torch.flatten(x, 1)
    y = jnp.maximum(y @ params["fc1_w"].T + params["fc1_b"], 0.0)
    y = jnp.maximum(y @ params["fc2_w"].T + params["fc2_b"], 0.0)
    return y @ params["fc3_w"].T + params["fc3_b"]


# --------------------------------------------------------------------------
if __name__ == "__main__":
    key = jax.random.PRNGKey(0)
    k_param, k_input = jax.random.split(key)

    params = init_params(k_param)
    kparams = prepare_kernel_params(params)

    # Input size is forced to 28x28 by fc1's 16*4*4 flatten.  Batch = 2.
    x = jax.random.normal(k_input, (B, 1, H_IN, H_IN), jnp.float32)

    out = jax.block_until_ready(net_forward(kparams, x))

    assert out.shape == (B, N3), out.shape
    assert bool(jnp.all(jnp.isfinite(out)))

    ref = reference_forward(params, x)
    max_abs = float(jnp.max(jnp.abs(out - ref)))
    rel = float(jnp.linalg.norm(out - ref) / (jnp.linalg.norm(ref) + 1e-12))
    # bf16 matmul operands (f32 accumulation) vs the pure-f32 reference:
    # ~1e-2-scale absolute agreement; the relative-Frobenius check keeps
    # layout/permutation bugs from hiding inside the absolute tolerance.
    assert bool(jnp.allclose(out, ref, rtol=2e-2, atol=2e-2)), (max_abs, rel)
    assert rel < 0.15, (max_abs, rel)

    print("KERNEL_OK")
</pallas_src>

<mosaic_0001>
module attributes {stable_mosaic.version = 11 : i64} {
  func.func @_lenet_kernel(%arg0: i32, %arg1: memref<56x28xf32, #tpu.memory_space<vmem>>, %arg2: memref<168x144xbf16, #tpu.memory_space<vmem>>, %arg3: memref<1544x128xbf16, #tpu.memory_space<vmem>>, %arg4: memref<2x128xf32, #tpu.memory_space<vmem>>) attributes {dimension_semantics = [#tpu.dimension_semantics<arbitrary>], iteration_bounds = array<i64: 1>, scalar_prefetch = 0 : i64, scratch_operands = 0 : i64, tpu.core_type = #tpu.core_type<tc>, window_params = [{pipeline_mode = #tpu.pipeline_mode<synchronous>, transform_indices = @transform_0, window_bounds = array<i64: 56, 28>}, {pipeline_mode = #tpu.pipeline_mode<synchronous>, transform_indices = @transform_1, window_bounds = array<i64: 168, 144>}, {pipeline_mode = #tpu.pipeline_mode<synchronous>, transform_indices = @transform_2, window_bounds = array<i64: 1544, 128>}, {pipeline_mode = #tpu.pipeline_mode<synchronous>, transform_indices = @transform_3, window_bounds = array<i64: 2, 128>}]} {
    %c0 = arith.constant 0 : index
    %c0_0 = arith.constant 0 : index
    %0 = vector.load %arg1[%c0, %c0_0] : memref<56x28xf32, #tpu.memory_space<vmem>>, vector<56x28xf32>
    %1 = arith.truncf %0 : vector<56x28xf32> to vector<56x28xbf16>
    %2 = vector.extract_strided_slice %1 {offsets = [0, 0], sizes = [48, 28], strides = [1, 1]} : vector<56x28xbf16> to vector<48x28xbf16>
    %c0_1 = arith.constant 0 : index
    %c0_2 = arith.constant 0 : index
    %3 = vector.load %arg2[%c0_1, %c0_2] : memref<168x144xbf16, #tpu.memory_space<vmem>>, vector<28x144xbf16>
    %cst = arith.constant dense<0.000000e+00> : vector<48x144xf32>
    %4 = tpu.matmul %2, %3, %cst {dimension_numbers = #tpu.dot_dimension_numbers<[1], [0], [0], [1], [0, 0, 1, 1], [], []>} : vector<48x28xbf16>, vector<28x144xbf16>, vector<48x144xf32> -> vector<48x144xf32>
    %5 = vector.extract_strided_slice %1 {offsets = [2, 0], sizes = [48, 28], strides = [1, 1]} : vector<56x28xbf16> to vector<48x28xbf16>
    %c32 = arith.constant 32 : index
    %c0_3 = arith.constant 0 : index
    %6 = vector.load %arg2[%c32, %c0_3] : memref<168x144xbf16, #tpu.memory_space<vmem>>, vector<28x144xbf16>
    %cst_4 = arith.constant dense<0.000000e+00> : vector<48x144xf32>
    %7 = tpu.matmul %5, %6, %cst_4 {dimension_numbers = #tpu.dot_dimension_numbers<[1], [0], [0], [1], [0, 0, 1, 1], [], []>} : vector<48x28xbf16>, vector<28x144xbf16>, vector<48x144xf32> -> vector<48x144xf32>
    %8 = arith.addf %4, %7 : vector<48x144xf32>
    %9 = vector.extract_strided_slice %1 {offsets = [4, 0], sizes = [48, 28], strides = [1, 1]} : vector<56x28xbf16> to vector<48x28xbf16>
    %c64 = arith.constant 64 : index
    %c0_5 = arith.constant 0 : index
    %10 = vector.load %arg2[%c64, %c0_5] : memref<168x144xbf16, #tpu.memory_space<vmem>>, vector<28x144xbf16>
    %cst_6 = arith.constant dense<0.000000e+00> : vector<48x144xf32>
    %11 = tpu.matmul %9, %10, %cst_6 {dimension_numbers = #tpu.dot_dimension_numbers<[1], [0], [0], [1], [0, 0, 1, 1], [], []>} : vector<48x28xbf16>, vector<28x144xbf16>, vector<48x144xf32> -> vector<48x144xf32>
    %12 = arith.addf %8, %11 : vector<48x144xf32>
    %13 = vector.extract_strided_slice %1 {offsets = [6, 0], sizes = [48, 28], strides = [1, 1]} : vector<56x28xbf16> to vector<48x28xbf16>
    %c96 = arith.constant 96 : index
    %c0_7 = arith.constant 0 : index
    %14 = vector.load %arg2[%c96, %c0_7] : memref<168x144xbf16, #tpu.memory_space<vmem>>, vector<28x144xbf16>
    %cst_8 = arith.constant dense<0.000000e+00> : vector<48x144xf32>
    %15 = tpu.matmul %13, %14, %cst_8 {dimension_numbers = #tpu.dot_dimension_numbers<[1], [0], [0], [1], [0, 0, 1, 1], [], []>} : vector<48x28xbf16>, vector<28x144xbf16>, vector<48x144xf32> -> vector<48x144xf32>
    %16 = arith.addf %12, %15 : vector<48x144xf32>
    %17 = vector.extract_strided_slice %1 {offsets = [8, 0], sizes = [48, 28], strides = [1, 1]} : vector<56x28xbf16> to vector<48x28xbf16>
    %c128 = arith.constant 128 : index
    %c0_9 = arith.constant 0 : index
    %18 = vector.load %arg2[%c128, %c0_9] : memref<168x144xbf16, #tpu.memory_space<vmem>>, vector<28x144xbf16>
    %cst_10 = arith.constant dense<0.000000e+00> : vector<48x144xf32>
    %19 = tpu.matmul %17, %18, %cst_10 {dimension_numbers = #tpu.dot_dimension_numbers<[1], [0], [0], [1], [0, 0, 1, 1], [], []>} : vector<48x28xbf16>, vector<28x144xbf16>, vector<48x144xf32> -> vector<48x144xf32>
    %20 = arith.addf %16, %19 : vector<48x144xf32>
    %c160 = arith.constant 160 : index
    %c0_11 = arith.constant 0 : index
    %21 = vector.load %arg2[%c160, %c0_11] : memref<168x144xbf16, #tpu.memory_space<vmem>>, vector<1x144xbf16>
    %22 = arith.extf %21 : vector<1x144xbf16> to vector<1x144xf32>
    %23 = vector.broadcast %22 : vector<1x144xf32> to vector<48x144xf32>
    %24 = arith.addf %20, %23 : vector<48x144xf32>
    %cst_12 = arith.constant 0.000000e+00 : f32
    %25 = vector.broadcast %cst_12 : f32 to vector<48x144xf32>
    %26 = arith.maximumf %24, %25 : vector<48x144xf32>
    %27 = vector.extract_strided_slice %26 {offsets = [0, 0], sizes = [46, 144], strides = [1, 1]} : vector<48x144xf32> to vector<46x144xf32>
    %28 = vector.extract_strided_slice %26 {offsets = [2, 0], sizes = [46, 144], strides = [1, 1]} : vector<48x144xf32> to vector<46x144xf32>
    %29 = arith.maximumf %27, %28 : vector<46x144xf32>
    %30 = vector.extract_strided_slice %29 {offsets = [0, 0], sizes = [46, 143], strides = [1, 1]} : vector<46x144xf32> to vector<46x143xf32>
    %31 = vector.extract_strided_slice %29 {offsets = [0, 1], sizes = [46, 143], strides = [1, 1]} : vector<46x144xf32> to vector<46x143xf32>
    %32 = arith.maximumf %30, %31 : vector<46x143xf32>
    %c0_13 = arith.constant 0 : index
    %c0_14 = arith.constant 0 : index
    %33 = vector.load %arg3[%c0_13, %c0_14] : memref<1544x128xbf16, #tpu.memory_space<vmem>>, vector<24x46xbf16>
    %34 = arith.truncf %32 : vector<46x143xf32> to vector<46x143xbf16>
    %cst_15 = arith.constant dense<0.000000e+00> : vector<24x143xf32>
    %35 = tpu.matmul %33, %34, %cst_15 {dimension_numbers = #tpu.dot_dimension_numbers<[1], [0], [0], [1], [0, 0, 1, 1], [], []>} : vector<24x46xbf16>, vector<46x143xbf16>, vector<24x143xf32> -> vector<24x143xf32>
    %36 = arith.truncf %35 : vector<24x143xf32> to vector<24x143xbf16>
    %37 = vector.extract_strided_slice %36 {offsets = [0, 0], sizes = [16, 143], strides = [1, 1]} : vector<24x143xbf16> to vector<16x143xbf16>
    %c24 = arith.constant 24 : index
    %c0_16 = arith.constant 0 : index
    %38 = vector.load %arg3[%c24, %c0_16] : memref<1544x128xbf16, #tpu.memory_space<vmem>>, vector<143x128xbf16>
    %cst_17 = arith.constant dense<0.000000e+00> : vector<16x128xf32>
    %39 = tpu.matmul %37, %38, %cst_17 {dimension_numbers = #tpu.dot_dimension_numbers<[1], [0], [0], [1], [0, 0, 1, 1], [], []>} : vector<16x143xbf16>, vector<143x128xbf16>, vector<16x128xf32> -> vector<16x128xf32>
    %40 = vector.extract_strided_slice %36 {offsets = [2, 0], sizes = [16, 143], strides = [1, 1]} : vector<24x143xbf16> to vector<16x143xbf16>
    %c168 = arith.constant 168 : index
    %c0_18 = arith.constant 0 : index
    %41 = vector.load %arg3[%c168, %c0_18] : memref<1544x128xbf16, #tpu.memory_space<vmem>>, vector<143x128xbf16>
    %cst_19 = arith.constant dense<0.000000e+00> : vector<16x128xf32>
    %42 = tpu.matmul %40, %41, %cst_19 {dimension_numbers = #tpu.dot_dimension_numbers<[1], [0], [0], [1], [0, 0, 1, 1], [], []>} : vector<16x143xbf16>, vector<143x128xbf16>, vector<16x128xf32> -> vector<16x128xf32>
    %43 = arith.addf %39, %42 : vector<16x128xf32>
    %44 = vector.extract_strided_slice %36 {offsets = [4, 0], sizes = [16, 143], strides = [1, 1]} : vector<24x143xbf16> to vector<16x143xbf16>
    %c312 = arith.constant 312 : index
    %c0_20 = arith.constant 0 : index
    %45 = vector.load %arg3[%c312, %c0_20] : memref<1544x128xbf16, #tpu.memory_space<vmem>>, vector<143x128xbf16>
    %cst_21 = arith.constant dense<0.000000e+00> : vector<16x128xf32>
    %46 = tpu.matmul %44, %45, %cst_21 {dimension_numbers = #tpu.dot_dimension_numbers<[1], [0], [0], [1], [0, 0, 1, 1], [], []>} : vector<16x143xbf16>, vector<143x128xbf16>, vector<16x128xf32> -> vector<16x128xf32>
    %47 = arith.addf %43, %46 : vector<16x128xf32>
    %48 = vector.extract_strided_slice %36 {offsets = [6, 0], sizes = [16, 143], strides = [1, 1]} : vector<24x143xbf16> to vector<16x143xbf16>
    %c456 = arith.constant 456 : index
    %c0_22 = arith.constant 0 : index
    %49 = vector.load %arg3[%c456, %c0_22] : memref<1544x128xbf16, #tpu.memory_space<vmem>>, vector<143x128xbf16>
    %cst_23 = arith.constant dense<0.000000e+00> : vector<16x128xf32>
    %50 = tpu.matmul %48, %49, %cst_23 {dimension_numbers = #tpu.dot_dimension_numbers<[1], [0], [0], [1], [0, 0, 1, 1], [], []>} : vector<16x143xbf16>, vector<143x128xbf16>, vector<16x128xf32> -> vector<16x128xf32>
    %51 = arith.addf %47, %50 : vector<16x128xf32>
    %52 = vector.extract_strided_slice %36 {offsets = [8, 0], sizes = [16, 143], strides = [1, 1]} : vector<24x143xbf16> to vector<16x143xbf16>
    %c600 = arith.constant 600 : index
    %c0_24 = arith.constant 0 : index
    %53 = vector.load %arg3[%c600, %c0_24] : memref<1544x128xbf16, #tpu.memory_space<vmem>>, vector<143x128xbf16>
    %cst_25 = arith.constant dense<0.000000e+00> : vector<16x128xf32>
    %54 = tpu.matmul %52, %53, %cst_25 {dimension_numbers = #tpu.dot_dimension_numbers<[1], [0], [0], [1], [0, 0, 1, 1], [], []>} : vector<16x143xbf16>, vector<143x128xbf16>, vector<16x128xf32> -> vector<16x128xf32>
    %55 = arith.addf %51, %54 : vector<16x128xf32>
    %c744 = arith.constant 744 : index
    %c0_26 = arith.constant 0 : index
    %56 = vector.load %arg3[%c744, %c0_26] : memref<1544x128xbf16, #tpu.memory_space<vmem>>, vector<1x128xbf16>
    %57 = arith.extf %56 : vector<1x128xbf16> to vector<1x128xf32>
    %58 = vector.broadcast %57 : vector<1x128xf32> to vector<16x128xf32>
    %59 = arith.addf %55, %58 : vector<16x128xf32>
    %cst_27 = arith.constant 0.000000e+00 : f32
    %60 = vector.broadcast %cst_27 : f32 to vector<16x128xf32>
    %61 = arith.maximumf %59, %60 : vector<16x128xf32>
    %62 = vector.extract_strided_slice %61 {offsets = [0, 0], sizes = [14, 128], strides = [1, 1]} : vector<16x128xf32> to vector<14x128xf32>
    %63 = vector.extract_strided_slice %61 {offsets = [2, 0], sizes = [14, 128], strides = [1, 1]} : vector<16x128xf32> to vector<14x128xf32>
    %64 = arith.maximumf %62, %63 : vector<14x128xf32>
    %65 = vector.extract_strided_slice %64 {offsets = [0, 0], sizes = [14, 127], strides = [1, 1]} : vector<14x128xf32> to vector<14x127xf32>
    %66 = vector.extract_strided_slice %64 {offsets = [0, 1], sizes = [14, 127], strides = [1, 1]} : vector<14x128xf32> to vector<14x127xf32>
    %67 = arith.maximumf %65, %66 : vector<14x127xf32>
    %68 = arith.truncf %67 : vector<14x127xf32> to vector<14x127xbf16>
    %69 = vector.extract_strided_slice %68 {offsets = [0, 0], sizes = [2, 127], strides = [1, 1]} : vector<14x127xbf16> to vector<2x127xbf16>
    %c752 = arith.constant 752 : index
    %c0_28 = arith.constant 0 : index
    %70 = vector.load %arg3[%c752, %c0_28] : memref<1544x128xbf16, #tpu.memory_space<vmem>>, vector<127x128xbf16>
    %cst_29 = arith.constant dense<0.000000e+00> : vector<2x128xf32>
    %71 = tpu.matmul %69, %70, %cst_29 {dimension_numbers = #tpu.dot_dimension_numbers<[1], [0], [0], [1], [0, 0, 1, 1], [], []>} : vector<2x127xbf16>, vector<127x128xbf16>, vector<2x128xf32> -> vector<2x128xf32>
    %72 = vector.extract_strided_slice %68 {offsets = [4, 0], sizes = [2, 127], strides = [1, 1]} : vector<14x127xbf16> to vector<2x127xbf16>
    %c880 = arith.constant 880 : index
    %c0_30 = arith.constant 0 : index
    %73 = vector.load %arg3[%c880, %c0_30] : memref<1544x128xbf16, #tpu.memory_space<vmem>>, vector<127x128xbf16>
    %cst_31 = arith.constant dense<0.000000e+00> : vector<2x128xf32>
    %74 = tpu.matmul %72, %73, %cst_31 {dimension_numbers = #tpu.dot_dimension_numbers<[1], [0], [0], [1], [0, 0, 1, 1], [], []>} : vector<2x127xbf16>, vector<127x128xbf16>, vector<2x128xf32> -> vector<2x128xf32>
    %75 = arith.addf %71, %74 : vector<2x128xf32>
    %76 = vector.extract_strided_slice %68 {offsets = [8, 0], sizes = [2, 127], strides = [1, 1]} : vector<14x127xbf16> to vector<2x127xbf16>
    %c1008 = arith.constant 1008 : index
    %c0_32 = arith.constant 0 : index
    %77 = vector.load %arg3[%c1008, %c0_32] : memref<1544x128xbf16, #tpu.memory_space<vmem>>, vector<127x128xbf16>
    %cst_33 = arith.constant dense<0.000000e+00> : vector<2x128xf32>
    %78 = tpu.matmul %76, %77, %cst_33 {dimension_numbers = #tpu.dot_dimension_numbers<[1], [0], [0], [1], [0, 0, 1, 1], [], []>} : vector<2x127xbf16>, vector<127x128xbf16>, vector<2x128xf32> -> vector<2x128xf32>
    %79 = arith.addf %75, %78 : vector<2x128xf32>
    %80 = vector.extract_strided_slice %68 {offsets = [12, 0], sizes = [2, 127], strides = [1, 1]} : vector<14x127xbf16> to vector<2x127xbf16>
    %c1136 = arith.constant 1136 : index
    %c0_34 = arith.constant 0 : index
    %81 = vector.load %arg3[%c1136, %c0_34] : memref<1544x128xbf16, #tpu.memory_space<vmem>>, vector<127x128xbf16>
    %cst_35 = arith.constant dense<0.000000e+00> : vector<2x128xf32>
    %82 = tpu.matmul %80, %81, %cst_35 {dimension_numbers = #tpu.dot_dimension_numbers<[1], [0], [0], [1], [0, 0, 1, 1], [], []>} : vector<2x127xbf16>, vector<127x128xbf16>, vector<2x128xf32> -> vector<2x128xf32>
    %83 = arith.addf %79, %82 : vector<2x128xf32>
    %c1264 = arith.constant 1264 : index
    %c0_36 = arith.constant 0 : index
    %84 = vector.load %arg3[%c1264, %c0_36] : memref<1544x128xbf16, #tpu.memory_space<vmem>>, vector<1x128xbf16>
    %85 = arith.extf %84 : vector<1x128xbf16> to vector<1x128xf32>
    %86 = vector.broadcast %85 : vector<1x128xf32> to vector<2x128xf32>
    %87 = arith.addf %83, %86 : vector<2x128xf32>
    %cst_37 = arith.constant 0.000000e+00 : f32
    %88 = vector.broadcast %cst_37 : f32 to vector<2x128xf32>
    %89 = arith.maximumf %87, %88 : vector<2x128xf32>
    %90 = arith.truncf %89 : vector<2x128xf32> to vector<2x128xbf16>
    %c1272 = arith.constant 1272 : index
    %c0_38 = arith.constant 0 : index
    %91 = vector.load %arg3[%c1272, %c0_38] : memref<1544x128xbf16, #tpu.memory_space<vmem>>, vector<128x128xbf16>
    %cst_39 = arith.constant dense<0.000000e+00> : vector<2x128xf32>
    %92 = tpu.matmul %90, %91, %cst_39 {dimension_numbers = #tpu.dot_dimension_numbers<[1], [0], [0], [1], [0, 0, 1, 1], [], []>} : vector<2x128xbf16>, vector<128x128xbf16>, vector<2x128xf32> -> vector<2x128xf32>
    %c1400 = arith.constant 1400 : index
    %c0_40 = arith.constant 0 : index
    %93 = vector.load %arg3[%c1400, %c0_40] : memref<1544x128xbf16, #tpu.memory_space<vmem>>, vector<1x128xbf16>
    %94 = arith.extf %93 : vector<1x128xbf16> to vector<1x128xf32>
    %95 = vector.broadcast %94 : vector<1x128xf32> to vector<2x128xf32>
    %96 = arith.addf %92, %95 : vector<2x128xf32>
    %cst_41 = arith.constant 0.000000e+00 : f32
    %97 = vector.broadcast %cst_41 : f32 to vector<2x128xf32>
    %98 = arith.maximumf %96, %97 : vector<2x128xf32>
    %99 = arith.truncf %98 : vector<2x128xf32> to vector<2x128xbf16>
    %c1408 = arith.constant 1408 : index
    %c0_42 = arith.constant 0 : index
    %100 = vector.load %arg3[%c1408, %c0_42] : memref<1544x128xbf16, #tpu.memory_space<vmem>>, vector<128x128xbf16>
    %cst_43 = arith.constant dense<0.000000e+00> : vector<2x128xf32>
    %101 = tpu.matmul %99, %100, %cst_43 {dimension_numbers = #tpu.dot_dimension_numbers<[1], [0], [0], [1], [0, 0, 1, 1], [], []>} : vector<2x128xbf16>, vector<128x128xbf16>, vector<2x128xf32> -> vector<2x128xf32>
    %c1536 = arith.constant 1536 : index
    %c0_44 = arith.constant 0 : index
    %102 = vector.load %arg3[%c1536, %c0_44] : memref<1544x128xbf16, #tpu.memory_space<vmem>>, vector<1x128xbf16>
    %103 = arith.extf %102 : vector<1x128xbf16> to vector<1x128xf32>
    %104 = vector.broadcast %103 : vector<1x128xf32> to vector<2x128xf32>
    %105 = arith.addf %101, %104 : vector<2x128xf32>
    %c0_45 = arith.constant 0 : index
    %c0_46 = arith.constant 0 : index
    %106 = vector.load %arg4[%c0_45, %c0_46] : memref<2x128xf32, #tpu.memory_space<vmem>>, vector<2x128xf32>
    tpu.vector_store %arg4[%c0_45, %c0_46], %105 {strides = array<i32>} : memref<2x128xf32, #tpu.memory_space<vmem>>, vector<2x128xf32>,
    return
  }
  func.func @transform_0(%arg0: i32) -> (i32, i32) {
    %c0_i32 = arith.constant 0 : i32
    %c0_i32_0 = arith.constant 0 : i32
    %c0_i32_1 = arith.constant 0 : i32
    return %c0_i32, %c0_i32_0 : i32, i32
  }
  func.func @transform_1(%arg0: i32) -> (i32, i32) {
    %c0_i32 = arith.constant 0 : i32
    %c0_i32_0 = arith.constant 0 : i32
    %c0_i32_1 = arith.constant 0 : i32
    return %c0_i32, %c0_i32_0 : i32, i32
  }
  func.func @transform_2(%arg0: i32) -> (i32, i32) {
    %c0_i32 = arith.constant 0 : i32
    %c0_i32_0 = arith.constant 0 : i32
    %c0_i32_1 = arith.constant 0 : i32
    return %c0_i32, %c0_i32_0 : i32, i32
  }
  func.func @transform_3(%arg0: i32) -> (i32, i32) {
    %c0_i32 = arith.constant 0 : i32
    %c0_i32_0 = arith.constant 0 : i32
    %c0_i32_1 = arith.constant 0 : i32
    return %c0_i32, %c0_i32_0 : i32, i32
  }
}

</mosaic_0001>

<llo_original>
// kernel: net_forward.1
$region0: #{net_forward.1}
  #allocation0 [shape = 'u32[]', space=smem, size = 0x4, offset = 0x4, fixed_abs, tag = 'smem constant byte address 0x4 - core index']
  #allocation1 [shape = 'u32[144,128]{1,0:T(1,128)}', space=vmem, size = 0x12000, scoped, tag = 'internal scratch']
  %s0 = inlined_call_operand.vmem [shape: f32[56,28], index: 0, kind: input, shape index: {}]
  %s1 = inlined_call_operand.vmem [shape: bf16[168,144], index: 1, kind: input, shape index: {}]
  %s2 = inlined_call_operand.hbm [shape: bf16[1544,128], index: 2, kind: input, shape index: {}]
  %s3 = inlined_call_operand.hbm [shape: f32[2,128], index: 3, kind: output, shape index: {}]
  %s4 = sld [smem:[#allocation0]]
  $region26: #{net_forward.1} parent=0
    _
  %s6 = ssub.s32 1, %s4
  %s7 = scalar_select 0, %s6, %s4
  $region1: #{net_forward.1} parent=0
    #allocation2 [shape = 'u8[395264]{0}', space=vmem, size = 0x60800, scoped, tag = 'input window, operand 2, single buffered']
    #allocation3 [shape = 's32[1]{0}', space=sflag, size = 0x4, scoped, tag = 'scoped memory for net_forward.1']
    #allocation4 [shape = 's32[1]{0}', space=sflag, size = 0x4, scoped, tag = 'scoped memory for net_forward.1']
    #allocation5 [shape = 'u8[1024]{0}', space=vmem, size = 0x400, scoped, tag = 'output window, operand 0, single buffered']
    %8 = vsyncpa [#allocation3], 0
    %9 = vsyncpa [#allocation4], 0
    // Predicated region
    $region2: #{net_forward.1} parent=1 // pred_check
      _
    $region3: #{net_forward.1} parent=1 // pred_check_branch
      %11 = sbr.rel (0) target = $region5
    $region4: #{net_forward.1} parent=1 // pred_region
      _
    $region5: #{net_forward.1} parent=1 // pred_fallthru
      _
    // Predicated region
    $region6: #{net_forward.1} parent=1 // pred_check
      _
    $region7: #{net_forward.1} parent=1 // pred_check_branch
      %13 = sbr.rel (0) target = $region9
    $region8: #{net_forward.1} parent=1 // pred_region
      _
    $region9: #{net_forward.1} parent=1 // pred_fallthru
      _
    // Predicated region
    $region10: #{net_forward.1} parent=1 // pred_check
      _
    $region11: #{net_forward.1} parent=1 // pred_check_branch
      %15 = sbr.rel (0) target = $region13
    $region12: #{net_forward.1} parent=1 // pred_region
      %s17 = ssub.s32 12352, 12352
      %18 = vsyncadd [#allocation3], %s17
      %s19 = sshll.u32 [#allocation2], 4
      %s20 = int_to_ptr.vmem [resolvable:$true] %s19
      %25 = dma.hbm_to_vmem [thread:$0]  %s2, 12352, %s20, [#allocation3], 64, 64, 4
    $region13: #{net_forward.1} parent=1 // pred_fallthru
      _
    // Predicated region
    $region14: #{net_forward.1} parent=1 // pred_check
      _
    $region15: #{net_forward.1} parent=1 // pred_check_branch
      %27 = sbr.rel (0) target = $region17
    $region16: #{net_forward.1} parent=1 // pred_region
      %28 = dma.done [#allocation3], 12352
    $region17: #{net_forward.1} parent=1 // pred_fallthru
      _
    %v30 = vld [vmem:[%s0] sm:$0xff]
    %v31 = vld [vmem:[%s0 + $0x8] sm:$0xff]
    %v32 = vld [vmem:[%s0 + $0x10] sm:$0xff]
    %v33 = vld [vmem:[%s0 + $0x18] sm:$0xff]
    %v34 = vld [vmem:[%s0 + $0x20] sm:$0xff]
    %v35 = vld [vmem:[%s0 + $0x28] sm:$0xff]
    %v36 = vld [vmem:[%s0 + $0x30] sm:$0xff]
    %v37 = vpack.c.bf16 %v31, %v30
    %v38 = vpack.c.bf16 %v33, %v32
    %v39 = vpack.c.bf16 %v35, %v34
    %v40 = vpack.c.bf16 %v36, %v36
    %v41 = vld [vmem:[%s1] sm:$0xff]
    %v42 = vld [vmem:[%s1 + $0x8] sm:$0xff]
    %v43 = vld [vmem:[%s1 + $0x10] sm:$0xff]
    %v44 = vld [vmem:[%s1 + $0x18] sm:$0x33]
    %v45 = vld [vmem:[%s1 + $0x20] sm:$0xff]
    %v46 = vld [vmem:[%s1 + $0x28] sm:$0xff]
    %v47 = vld [vmem:[%s1 + $0x30] sm:$0xff]
    %v48 = vld [vmem:[%s1 + $0x38] sm:$0x33]
    %vm53 = vcmask 1046528
    %v54 = vrot.slane %v37, 1
    %v55 = vrot.slane %v38, 1
    %v56 = vsel %vm53, %v54, %v55
    %v57 = vrot.slane %v39, 1
    %v58 = vsel %vm53, %v55, %v57
    %v59 = vrot.slane %v40, 1
    %v60 = vsel %vm53, %v57, %v59
    %v65 = vunpack.c.l.b16 %v45
    %v66 = vunpack.c.h.b16 %v45
    %v67 = vunpack.c.l.b16 %v46
    %v68 = vunpack.c.h.b16 %v46
    %v69 = vunpack.c.l.b16 %v47
    %v70 = vunpack.c.h.b16 %v47
    %v71 = vunpack.c.l.b16 %v48
    %v72 = vunpack.c.h.b16 %v48
    %v73 = vpack.c.b16 %v67, %v65
    %v74 = vpack.c.b16 %v68, %v66
    %v75 = vpack.c.b16 %v71, %v69
    %v76 = vpack.c.b16 %v72, %v70
    %vm79 = vcmask 228352
    %v81 = vsel %vm79, %v56, 0
    %v84 = vsel %vm79, %v58, 0
    %v87 = vsel %vm79, %v60, 0
    %vm89 = vcmask 1045504
    %v91 = vsel %vm89, %v75, 0
    %v94 = vsel %vm89, %v76, 0
    %96 = vmatprep.subr.bf16.mxu0 0
    %97 = vmatpush1.bf16.msra.mxu0 0
    %98 = vmatprep.subr.bf16.mxu0 0
    %99 = vmatpush1.bf16.msra.mxu0 0
    %100 = vmatprep.subr.bf16.mxu0 0
    %101 = vmatpush1.bf16.msra.mxu0 0
    %102 = vmatprep.subr.bf16.mxu0 0
    %103 = vmatpush1.bf16.msra.mxu0 0
    %104 = vmatprep.subr.bf16.mxu0 0
    %105 = vmatpush1.bf16.msra.mxu0 0
    %106 = vmatprep.subr.bf16.mxu0 0
    %107 = vmatpush1.bf16.msra.mxu0 0
    %108 = vmatprep.subr.bf16.mxu0 %v94
    %109 = vmatpush1.bf16.msra.mxu0 %v91
    %110 = vmatprep.subr.bf16.mxu0 %v74
    %111 = vmatpush1.bf16.msra.mxu0 %v73
    %112 = vmatprep.subr.bf16.mxu0 0
    %113 = vmatpush2.bf16.msra.mxu0 0
    %114 = vmatprep.subr.bf16.mxu0 0
    %115 = vmatpush2.bf16.msra.mxu0 0
    %116 = vmatprep.subr.bf16.mxu0 0
    %117 = vmatpush2.bf16.msra.mxu0 0
    %118 = vmatprep.subr.bf16.mxu0 0
    %119 = vmatpush2.bf16.msra.mxu0 0
    %120 = vmatprep.subr.bf16.mxu0 0
    %121 = vmatpush2.bf16.msra.mxu0 0
    %122 = vmatprep.subr.bf16.mxu0 0
    %123 = vmatpush2.bf16.msra.mxu0 0
    %124 = vmatprep.subr.bf16.mxu0 0
    %125 = vmatpush2.bf16.msra.mxu0 0
    %126 = vmatprep.subr.bf16.mxu0 0
    %127 = vmatpush2.bf16.msra.mxu0 0
    %128 = vmatprep.mubr.bf16.mxu0 0
    %129 = vmatmul.mubr.bf16.gmra.mxu0 %v81
    %v130 = vpop.f32.mrf.mxu0
    %v131 = vadd.f32 0.0, %v130
    %v132 = vpop.f32.mrf.mxu0
    %v133 = vadd.f32 0.0, %v132
    %v134 = vpop.f32.mrf.mxu0
    %v135 = vadd.f32 0.0, %v134
    %v136 = vpop.f32.mrf.mxu0
    %v137 = vadd.f32 0.0, %v136
    %138 = vmatprep.mubr.bf16.mxu0 0
    %139 = vmatmul.mubr.bf16.gmra.mxu0 %v84
    %v140 = vpop.f32.mrf.mxu0
    %v141 = vadd.f32 0.0, %v140
    %v142 = vpop.f32.mrf.mxu0
    %v143 = vadd.f32 0.0, %v142
    %v144 = vpop.f32.mrf.mxu0
    %v145 = vadd.f32 0.0, %v144
    %v146 = vpop.f32.mrf.mxu0
    %v147 = vadd.f32 0.0, %v146
    %148 = vmatprep.mubr.bf16.mxu0 0
    %149 = vmatmul.mubr.bf16.gmra.mxu0 %v87
    %v150 = vpop.f32.mrf.mxu0
    %v151 = vadd.f32 0.0, %v150
    %v152 = vpop.f32.mrf.mxu0
    %v153 = vadd.f32 0.0, %v152
    %v154 = vpop.f32.mrf.mxu0
    %v155 = vadd.f32 0.0, %v154
    %v156 = vpop.f32.mrf.mxu0
    %v157 = vadd.f32 0.0, %v156
    %158 = vdwg.mxu0
    %v163 = vunpack.c.l.b16 %v41
    %v164 = vunpack.c.h.b16 %v41
    %v165 = vunpack.c.l.b16 %v42
    %v166 = vunpack.c.h.b16 %v42
    %v167 = vunpack.c.l.b16 %v43
    %v168 = vunpack.c.h.b16 %v43
    %v169 = vunpack.c.l.b16 %v44
    %v170 = vunpack.c.h.b16 %v44
    %v171 = vpack.c.b16 %v165, %v163
    %v172 = vpack.c.b16 %v166, %v164
    %v173 = vpack.c.b16 %v169, %v167
    %v174 = vpack.c.b16 %v170, %v168
    %v178 = vsel %vm79, %v37, 0
    %v181 = vsel %vm79, %v38, 0
    %v184 = vsel %vm79, %v39, 0
    %v187 = vsel %vm89, %v173, 0
    %v190 = vsel %vm89, %v174, 0
    %192 = vmatprep.subr.bf16.mxu0 0
    %193 = vmatpush1.bf16.msra.mxu0 0
    %194 = vmatprep.subr.bf16.mxu0 0
    %195 = vmatpush1.bf16.msra.mxu0 0
    %196 = vmatprep.subr.bf16.mxu0 0
    %197 = vmatpush1.bf16.msra.mxu0 0
    %198 = vmatprep.subr.bf16.mxu0 0
    %199 = vmatpush1.bf16.msra.mxu0 0
    %200 = vmatprep.subr.bf16.mxu0 0
    %201 = vmatpush1.bf16.msra.mxu0 0
    %202 = vmatprep.subr.bf16.mxu0 0
    %203 = vmatpush1.bf16.msra.mxu0 0
    %204 = vmatprep.subr.bf16.mxu0 %v190
    %205 = vmatpush1.bf16.msra.mxu0 %v187
    %206 = vmatprep.subr.bf16.mxu0 %v172
    %207 = vmatpush1.bf16.msra.mxu0 %v171
    %208 = vmatprep.subr.bf16.mxu0 0
    %209 = vmatpush2.bf16.msra.mxu0 0
    %210 = vmatprep.subr.bf16.mxu0 0
    %211 = vmatpush2.bf16.msra.mxu0 0
    %212 = vmatprep.subr.bf16.mxu0 0
    %213 = vmatpush2.bf16.msra.mxu0 0
    %214 = vmatprep.subr.bf16.mxu0 0
    %215 = vmatpush2.bf16.msra.mxu0 0
    %216 = vmatprep.subr.bf16.mxu0 0
    %217 = vmatpush2.bf16.msra.mxu0 0
    %218 = vmatprep.subr.bf16.mxu0 0
    %219 = vmatpush2.bf16.msra.mxu0 0
    %220 = vmatprep.subr.bf16.mxu0 0
    %221 = vmatpush2.bf16.msra.mxu0 0
    %222 = vmatprep.subr.bf16.mxu0 0
    %223 = vmatpush2.bf16.msra.mxu0 0
    %224 = vmatprep.mubr.bf16.mxu0 0
    %225 = vmatmul.mubr.bf16.gmra.mxu0 %v178
    %v226 = vpop.f32.mrf.mxu0
    %v227 = vadd.f32 %v131, %v226
    %v228 = vpop.f32.mrf.mxu0
    %v229 = vadd.f32 %v133, %v228
    %v230 = vpop.f32.mrf.mxu0
    %v231 = vadd.f32 %v135, %v230
    %v232 = vpop.f32.mrf.mxu0
    %v233 = vadd.f32 %v137, %v232
    %234 = vmatprep.mubr.bf16.mxu0 0
    %235 = vmatmul.mubr.bf16.gmra.mxu0 %v181
    %v236 = vpop.f32.mrf.mxu0
    %v237 = vadd.f32 %v141, %v236
    %v238 = vpop.f32.mrf.mxu0
    %v239 = vadd.f32 %v143, %v238
    %v240 = vpop.f32.mrf.mxu0
    %v241 = vadd.f32 %v145, %v240
    %v242 = vpop.f32.mrf.mxu0
    %v243 = vadd.f32 %v147, %v242
    %244 = vmatprep.mubr.bf16.mxu0 0
    %245 = vmatmul.mubr.bf16.gmra.mxu0 %v184
    %v246 = vpop.f32.mrf.mxu0
    %v247 = vadd.f32 %v151, %v246
    %v248 = vpop.f32.mrf.mxu0
    %v249 = vadd.f32 %v153, %v248
    %v250 = vpop.f32.mrf.mxu0
    %v251 = vadd.f32 %v155, %v250
    %v252 = vpop.f32.mrf.mxu0
    %v253 = vadd.f32 %v157, %v252
    %254 = vdwg.mxu0
    %v255 = vld [vmem:[%s1 + $0x40] sm:$0xff]
    %v256 = vld [vmem:[%s1 + $0x48] sm:$0xff]
    %v257 = vld [vmem:[%s1 + $0x50] sm:$0xff]
    %v258 = vld [vmem:[%s1 + $0x58] sm:$0x33]
    %vm259 = vcmask 1045504
    %v260 = vrot.slane %v37, 2
    %v261 = vrot.slane %v38, 2
    %v262 = vsel %vm259, %v260, %v261
    %v263 = vrot.slane %v39, 2
    %v264 = vsel %vm259, %v261, %v263
    %v265 = vrot.slane %v40, 2
    %v266 = vsel %vm259, %v263, %v265
    %v271 = vunpack.c.l.b16 %v255
    %v272 = vunpack.c.h.b16 %v255
    %v273 = vunpack.c.l.b16 %v256
    %v274 = vunpack.c.h.b16 %v256
    %v275 = vunpack.c.l.b16 %v257
    %v276 = vunpack.c.h.b16 %v257
    %v277 = vunpack.c.l.b16 %v258
    %v278 = vunpack.c.h.b16 %v258
    %v279 = vpack.c.b16 %v273, %v271
    %v280 = vpack.c.b16 %v274, %v272
    %v281 = vpack.c.b16 %v277, %v275
    %v282 = vpack.c.b16 %v278, %v276
    %v286 = vsel %vm79, %v262, 0
    %v289 = vsel %vm79, %v264, 0
    %v292 = vsel %vm79, %v266, 0
    %v295 = vsel %vm89, %v281, 0
    %v298 = vsel %vm89, %v282, 0
    %300 = vmatprep.subr.bf16.mxu0 0
    %301 = vmatpush1.bf16.msra.mxu0 0
    %302 = vmatprep.subr.bf16.mxu0 0
    %303 = vmatpush1.bf16.msra.mxu0 0
    %304 = vmatprep.subr.bf16.mxu0 0
    %305 = vmatpush1.bf16.msra.mxu0 0
    %306 = vmatprep.subr.bf16.mxu0 0
    %307 = vmatpush1.bf16.msra.mxu0 0
    %308 = vmatprep.subr.bf16.mxu0 0
    %309 = vmatpush1.bf16.msra.mxu0 0
    %310 = vmatprep.subr.bf16.mxu0 0
    %311 = vmatpush1.bf16.msra.mxu0 0
    %312 = vmatprep.subr.bf16.mxu0 %v298
    %313 = vmatpush1.bf16.msra.mxu0 %v295
    %314 = vmatprep.subr.bf16.mxu0 %v280
    %315 = vmatpush1.bf16.msra.mxu0 %v279
    %316 = vmatprep.subr.bf16.mxu0 0
    %317 = vmatpush2.bf16.msra.mxu0 0
    %318 = vmatprep.subr.bf16.mxu0 0
    %319 = vmatpush2.bf16.msra.mxu0 0
    %320 = vmatprep.subr.bf16.mxu0 0
    %321 = vmatpush2.bf16.msra.mxu0 0
    %322 = vmatprep.subr.bf16.mxu0 0
    %323 = vmatpush2.bf16.msra.mxu0 0
    %324 = vmatprep.subr.bf16.mxu0 0
    %325 = vmatpush2.bf16.msra.mxu0 0
    %326 = vmatprep.subr.bf16.mxu0 0
    %327 = vmatpush2.bf16.msra.mxu0 0
    %328 = vmatprep.subr.bf16.mxu0 0
    %329 = vmatpush2.bf16.msra.mxu0 0
    %330 = vmatprep.subr.bf16.mxu0 0
    %331 = vmatpush2.bf16.msra.mxu0 0
    %332 = vmatprep.mubr.bf16.mxu0 0
    %333 = vmatmul.mubr.bf16.gmra.mxu0 %v286
    %v334 = vpop.f32.mrf.mxu0
    %v335 = vadd.f32 0.0, %v334
    %v336 = vpop.f32.mrf.mxu0
    %v337 = vadd.f32 0.0, %v336
    %v338 = vpop.f32.mrf.mxu0
    %v339 = vadd.f32 0.0, %v338
    %v340 = vpop.f32.mrf.mxu0
    %v341 = vadd.f32 0.0, %v340
    %342 = vmatprep.mubr.bf16.mxu0 0
    %343 = vmatmul.mubr.bf16.gmra.mxu0 %v289
    %v344 = vpop.f32.mrf.mxu0
    %v345 = vadd.f32 0.0, %v344
    %v346 = vpop.f32.mrf.mxu0
    %v347 = vadd.f32 0.0, %v346
    %v348 = vpop.f32.mrf.mxu0
    %v349 = vadd.f32 0.0, %v348
    %v350 = vpop.f32.mrf.mxu0
    %v351 = vadd.f32 0.0, %v350
    %352 = vmatprep.mubr.bf16.mxu0 0
    %353 = vmatmul.mubr.bf16.gmra.mxu0 %v292
    %v354 = vpop.f32.mrf.mxu0
    %v355 = vadd.f32 0.0, %v354
    %v356 = vpop.f32.mrf.mxu0
    %v357 = vadd.f32 0.0, %v356
    %v358 = vpop.f32.mrf.mxu0
    %v359 = vadd.f32 0.0, %v358
    %v360 = vpop.f32.mrf.mxu0
    %v361 = vadd.f32 0.0, %v360
    %362 = vdwg.mxu0
    %v363 = vadd.f32 %v227, %v335
    %v364 = vadd.f32 %v229, %v337
    %v365 = vadd.f32 %v231, %v339
    %v366 = vadd.f32 %v233, %v341
    %v367 = vadd.f32 %v237, %v345
    %v368 = vadd.f32 %v239, %v347
    %v369 = vadd.f32 %v241, %v349
    %v370 = vadd.f32 %v243, %v351
    %v371 = vadd.f32 %v247, %v355
    %v372 = vadd.f32 %v249, %v357
    %v373 = vadd.f32 %v251, %v359
    %v374 = vadd.f32 %v253, %v361
    %v375 = vld [vmem:[%s1 + $0x60] sm:$0xff]
    %v376 = vld [vmem:[%s1 + $0x68] sm:$0xff]
    %v377 = vld [vmem:[%s1 + $0x70] sm:$0xff]
    %v378 = vld [vmem:[%s1 + $0x78] sm:$0x33]
    %vm379 = vcmask 1044480
    %v380 = vrot.slane %v37, 3
    %v381 = vrot.slane %v38, 3
    %v382 = vsel %vm379, %v380, %v381
    %v383 = vrot.slane %v39, 3
    %v384 = vsel %vm379, %v381, %v383
    %v385 = vrot.slane %v40, 3
    %v386 = vsel %vm379, %v383, %v385
    %v391 = vunpack.c.l.b16 %v375
    %v392 = vunpack.c.h.b16 %v375
    %v393 = vunpack.c.l.b16 %v376
    %v394 = vunpack.c.h.b16 %v376
    %v395 = vunpack.c.l.b16 %v377
    %v396 = vunpack.c.h.b16 %v377
    %v397 = vunpack.c.l.b16 %v378
    %v398 = vunpack.c.h.b16 %v378
    %v399 = vpack.c.b16 %v393, %v391
    %v400 = vpack.c.b16 %v394, %v392
    %v401 = vpack.c.b16 %v397, %v395
    %v402 = vpack.c.b16 %v398, %v396
    %v406 = vsel %vm79, %v382, 0
    %v409 = vsel %vm79, %v384, 0
    %v412 = vsel %vm79, %v386, 0
    %v415 = vsel %vm89, %v401, 0
    %v418 = vsel %vm89, %v402, 0
    %420 = vmatprep.subr.bf16.mxu0 0
    %421 = vmatpush1.bf16.msra.mxu0 0
    %422 = vmatprep.subr.bf16.mxu0 0
    %423 = vmatpush1.bf16.msra.mxu0 0
    %424 = vmatprep.subr.bf16.mxu0 0
    %425 = vmatpush1.bf16.msra.mxu0 0
    %426 = vmatprep.subr.bf16.mxu0 0
    %427 = vmatpush1.bf16.msra.mxu0 0
    %428 = vmatprep.subr.bf16.mxu0 0
    %429 = vmatpush1.bf16.msra.mxu0 0
    %430 = vmatprep.subr.bf16.mxu0 0
    %431 = vmatpush1.bf16.msra.mxu0 0
    %432 = vmatprep.subr.bf16.mxu0 %v418
    %433 = vmatpush1.bf16.msra.mxu0 %v415
    %434 = vmatprep.subr.bf16.mxu0 %v400
    %435 = vmatpush1.bf16.msra.mxu0 %v399
    %436 = vmatprep.subr.bf16.mxu0 0
    %437 = vmatpush2.bf16.msra.mxu0 0
    %438 = vmatprep.subr.bf16.mxu0 0
    %439 = vmatpush2.bf16.msra.mxu0 0
    %440 = vmatprep.subr.bf16.mxu0 0
    %441 = vmatpush2.bf16.msra.mxu0 0
    %442 = vmatprep.subr.bf16.mxu0 0
    %443 = vmatpush2.bf16.msra.mxu0 0
    %444 = vmatprep.subr.bf16.mxu0 0
    %445 = vmatpush2.bf16.msra.mxu0 0
    %446 = vmatprep.subr.bf16.mxu0 0
    %447 = vmatpush2.bf16.msra.mxu0 0
    %448 = vmatprep.subr.bf16.mxu0 0
    %449 = vmatpush2.bf16.msra.mxu0 0
    %450 = vmatprep.subr.bf16.mxu0 0
    %451 = vmatpush2.bf16.msra.mxu0 0
    %452 = vmatprep.mubr.bf16.mxu0 0
    %453 = vmatmul.mubr.bf16.gmra.mxu0 %v406
    %v454 = vpop.f32.mrf.mxu0
    %v455 = vadd.f32 0.0, %v454
    %v456 = vpop.f32.mrf.mxu0
    %v457 = vadd.f32 0.0, %v456
    %v458 = vpop.f32.mrf.mxu0
    %v459 = vadd.f32 0.0, %v458
    %v460 = vpop.f32.mrf.mxu0
    %v461 = vadd.f32 0.0, %v460
    %462 = vmatprep.mubr.bf16.mxu0 0
    %463 = vmatmul.mubr.bf16.gmra.mxu0 %v409
    %v464 = vpop.f32.mrf.mxu0
    %v465 = vadd.f32 0.0, %v464
    %v466 = vpop.f32.mrf.mxu0
    %v467 = vadd.f32 0.0, %v466
    %v468 = vpop.f32.mrf.mxu0
    %v469 = vadd.f32 0.0, %v468
    %v470 = vpop.f32.mrf.mxu0
    %v471 = vadd.f32 0.0, %v470
    %472 = vmatprep.mubr.bf16.mxu0 0
    %473 = vmatmul.mubr.bf16.gmra.mxu0 %v412
    %v474 = vpop.f32.mrf.mxu0
    %v475 = vadd.f32 0.0, %v474
    %v476 = vpop.f32.mrf.mxu0
    %v477 = vadd.f32 0.0, %v476
    %v478 = vpop.f32.mrf.mxu0
    %v479 = vadd.f32 0.0, %v478
    %v480 = vpop.f32.mrf.mxu0
    %v481 = vadd.f32 0.0, %v480
    %482 = vdwg.mxu0
    %v483 = vadd.f32 %v363, %v455
    %v484 = vadd.f32 %v364, %v457
    %v485 = vadd.f32 %v365, %v459
    %v486 = vadd.f32 %v366, %v461
    %v487 = vadd.f32 %v367, %v465
    %v488 = vadd.f32 %v368, %v467
    %v489 = vadd.f32 %v369, %v469
    %v490 = vadd.f32 %v370, %v471
    %v491 = vadd.f32 %v371, %v475
    %v492 = vadd.f32 %v372, %v477
    %v493 = vadd.f32 %v373, %v479
    %v494 = vadd.f32 %v374, %v481
    %v495 = vld [vmem:[%s1 + $0x80] sm:$0xff]
    %v496 = vld [vmem:[%s1 + $0x88] sm:$0xff]
    %v497 = vld [vmem:[%s1 + $0x90] sm:$0xff]
    %v498 = vld [vmem:[%s1 + $0x98] sm:$0x33]
    %vm499 = vcmask 1043456
    %v500 = vrot.slane %v37, 4
    %v501 = vrot.slane %v38, 4
    %v502 = vsel %vm499, %v500, %v501
    %v503 = vrot.slane %v39, 4
    %v504 = vsel %vm499, %v501, %v503
    %v505 = vrot.slane %v40, 4
    %v506 = vsel %vm499, %v503, %v505
    %v511 = vunpack.c.l.b16 %v495
    %v512 = vunpack.c.h.b16 %v495
    %v513 = vunpack.c.l.b16 %v496
    %v514 = vunpack.c.h.b16 %v496
    %v515 = vunpack.c.l.b16 %v497
    %v516 = vunpack.c.h.b16 %v497
    %v517 = vunpack.c.l.b16 %v498
    %v518 = vunpack.c.h.b16 %v498
    %v519 = vpack.c.b16 %v513, %v511
    %v520 = vpack.c.b16 %v514, %v512
    %v521 = vpack.c.b16 %v517, %v515
    %v522 = vpack.c.b16 %v518, %v516
    %v526 = vsel %vm79, %v502, 0
    %v529 = vsel %vm79, %v504, 0
    %v532 = vsel %vm79, %v506, 0
    %v535 = vsel %vm89, %v521, 0
    %v538 = vsel %vm89, %v522, 0
    %540 = vmatprep.subr.bf16.mxu0 0
    %541 = vmatpush1.bf16.msra.mxu0 0
    %542 = vmatprep.subr.bf16.mxu0 0
    %543 = vmatpush1.bf16.msra.mxu0 0
    %544 = vmatprep.subr.bf16.mxu0 0
    %545 = vmatpush1.bf16.msra.mxu0 0
    %546 = vmatprep.subr.bf16.mxu0 0
    %547 = vmatpush1.bf16.msra.mxu0 0
    %548 = vmatprep.subr.bf16.mxu0 0
    %549 = vmatpush1.bf16.msra.mxu0 0
    %550 = vmatprep.subr.bf16.mxu0 0
    %551 = vmatpush1.bf16.msra.mxu0 0
    %552 = vmatprep.subr.bf16.mxu0 %v538
    %553 = vmatpush1.bf16.msra.mxu0 %v535
    %554 = vmatprep.subr.bf16.mxu0 %v520
    %555 = vmatpush1.bf16.msra.mxu0 %v519
    %556 = vmatprep.subr.bf16.mxu0 0
    %557 = vmatpush2.bf16.msra.mxu0 0
    %558 = vmatprep.subr.bf16.mxu0 0
    %559 = vmatpush2.bf16.msra.mxu0 0
    %560 = vmatprep.subr.bf16.mxu0 0
    %561 = vmatpush2.bf16.msra.mxu0 0
    %562 = vmatprep.subr.bf16.mxu0 0
    %563 = vmatpush2.bf16.msra.mxu0 0
    %564 = vmatprep.subr.bf16.mxu0 0
    %565 = vmatpush2.bf16.msra.mxu0 0
    %566 = vmatprep.subr.bf16.mxu0 0
    %567 = vmatpush2.bf16.msra.mxu0 0
    %568 = vmatprep.subr.bf16.mxu0 0
    %569 = vmatpush2.bf16.msra.mxu0 0
    %570 = vmatprep.subr.bf16.mxu0 0
    %571 = vmatpush2.bf16.msra.mxu0 0
    %572 = vmatprep.mubr.bf16.mxu0 0
    %573 = vmatmul.mubr.bf16.gmra.mxu0 %v526
    %v574 = vpop.f32.mrf.mxu0
    %v575 = vadd.f32 0.0, %v574
    %v576 = vpop.f32.mrf.mxu0
    %v577 = vadd.f32 0.0, %v576
    %v578 = vpop.f32.mrf.mxu0
    %v579 = vadd.f32 0.0, %v578
    %v580 = vpop.f32.mrf.mxu0
    %v581 = vadd.f32 0.0, %v580
    %582 = vmatprep.mubr.bf16.mxu0 0
    %583 = vmatmul.mubr.bf16.gmra.mxu0 %v529
    %v584 = vpop.f32.mrf.mxu0
    %v585 = vadd.f32 0.0, %v584
    %v586 = vpop.f32.mrf.mxu0
    %v587 = vadd.f32 0.0, %v586
    %v588 = vpop.f32.mrf.mxu0
    %v589 = vadd.f32 0.0, %v588
    %v590 = vpop.f32.mrf.mxu0
    %v591 = vadd.f32 0.0, %v590
    %592 = vmatprep.mubr.bf16.mxu0 0
    %593 = vmatmul.mubr.bf16.gmra.mxu0 %v532
    %v594 = vpop.f32.mrf.mxu0
    %v595 = vadd.f32 0.0, %v594
    %v596 = vpop.f32.mrf.mxu0
    %v597 = vadd.f32 0.0, %v596
    %v598 = vpop.f32.mrf.mxu0
    %v599 = vadd.f32 0.0, %v598
    %v600 = vpop.f32.mrf.mxu0
    %v601 = vadd.f32 0.0, %v600
    %602 = vdwg.mxu0
    %v603 = vadd.f32 %v483, %v575
    %v604 = vadd.f32 %v484, %v577
    %v605 = vadd.f32 %v485, %v579
    %v606 = vadd.f32 %v486, %v581
    %v607 = vadd.f32 %v487, %v585
    %v608 = vadd.f32 %v488, %v587
    %v609 = vadd.f32 %v489, %v589
    %v610 = vadd.f32 %v490, %v591
    %v611 = vadd.f32 %v491, %v595
    %v612 = vadd.f32 %v492, %v597
    %v613 = vadd.f32 %v493, %v599
    %v614 = vadd.f32 %v494, %v601
    %v615 = vld [vmem:[%s1 + $0xa0] sm:$0x11]
    %v616 = vunpack.c.l.bf16 %v615
    %v617 = vunpack.c.h.bf16 %v615
    %v618 = vlaneseq
    %v619 = vshrl.u32 %v618, 7
    %v620 = vsub.s32 0, %v619
    %v621 = vrot.slane %v616, %v620
    %v622 = vlaneseq
    %v623 = vshrl.u32 %v622, 7
    %v624 = vsub.s32 0, %v623
    %v625 = vrot.slane %v617, %v624
    %v626 = vadd.f32 %v603, %v621
    %v627 = vadd.f32 %v604, %v625
    %v628 = vadd.f32 %v605, %v621
    %v629 = vadd.f32 %v606, %v625
    %v630 = vadd.f32 %v607, %v621
    %v631 = vadd.f32 %v608, %v625
    %v632 = vadd.f32 %v609, %v621
    %v633 = vadd.f32 %v610, %v625
    %v634 = vadd.f32 %v611, %v621
    %v635 = vadd.f32 %v612, %v625
    %v636 = vadd.f32 %v613, %v621
    %v637 = vadd.f32 %v614, %v625
    %v638 = vmax.f32 %v626, 0.0
    %v639 = vmax.f32 %v627, 0.0
    %v640 = vmax.f32 %v628, 0.0
    %v641 = vmax.f32 %v629, 0.0
    %v642 = vmax.f32 %v630, 0.0
    %v643 = vmax.f32 %v631, 0.0
    %v644 = vmax.f32 %v632, 0.0
    %v645 = vmax.f32 %v633, 0.0
    %v646 = vmax.f32 %v634, 0.0
    %v647 = vmax.f32 %v635, 0.0
    %v648 = vmax.f32 %v636, 0.0
    %v649 = vmax.f32 %v637, 0.0
    %v662 = vrot.slane %v638, 2
    %v663 = vrot.slane %v640, 2
    %v664 = vsel %vm89, %v662, %v663
    %v665 = vrot.slane %v639, 2
    %v666 = vrot.slane %v641, 2
    %v667 = vsel %vm89, %v665, %v666
    %v668 = vrot.slane %v642, 2
    %v669 = vsel %vm89, %v663, %v668
    %v670 = vrot.slane %v643, 2
    %v671 = vsel %vm89, %v666, %v670
    %v672 = vrot.slane %v644, 2
    %v673 = vsel %vm89, %v668, %v672
    %v674 = vrot.slane %v645, 2
    %v675 = vsel %vm89, %v670, %v674
    %v676 = vrot.slane %v646, 2
    %v677 = vsel %vm89, %v672, %v676
    %v678 = vrot.slane %v647, 2
    %v679 = vsel %vm89, %v674, %v678
    %v680 = vrot.slane %v648, 2
    %v681 = vsel %vm89, %v676, %v680
    %v682 = vrot.slane %v649, 2
    %v683 = vsel %vm89, %v678, %v682
    %v696 = vmax.f32 %v638, %v664
    %v697 = vmax.f32 %v639, %v667
    %v698 = vmax.f32 %v640, %v669
    %v699 = vmax.f32 %v641, %v671
    %v700 = vmax.f32 %v642, %v673
    %v701 = vmax.f32 %v643, %v675
    %v702 = vmax.f32 %v644, %v677
    %v703 = vmax.f32 %v645, %v679
    %v704 = vmax.f32 %v646, %v681
    %v705 = vmax.f32 %v647, %v683
    %v706 = vmax.f32 %v648, %v680
    %v707 = vmax.f32 %v649, %v682
    %720 = vrot.lane.b32.xlu0 %v696, 127
    %v721 = vpop.permute.xlu0 %720
    %722 = vrot.lane.b32.xlu0 %v697, 127
    %v723 = vpop.permute.xlu0 %722
    %724 = vrot.lane.b32.xlu0 %v698, 127
    %v725 = vpop.permute.xlu0 %724
    %726 = vrot.lane.b32.xlu0 %v699, 127
    %v727 = vpop.permute.xlu0 %726
    %728 = vrot.lane.b32.xlu0 %v700, 127
    %v729 = vpop.permute.xlu0 %728
    %730 = vrot.lane.b32.xlu0 %v701, 127
    %v731 = vpop.permute.xlu0 %730
    %732 = vrot.lane.b32.xlu0 %v702, 127
    %v733 = vpop.permute.xlu0 %732
    %734 = vrot.lane.b32.xlu0 %v703, 127
    %v735 = vpop.permute.xlu0 %734
    %736 = vrot.lane.b32.xlu0 %v704, 127
    %v737 = vpop.permute.xlu0 %736
    %738 = vrot.lane.b32.xlu0 %v705, 127
    %v739 = vpop.permute.xlu0 %738
    %740 = vrot.lane.b32.xlu0 %v706, 127
    %v741 = vpop.permute.xlu0 %740
    %742 = vrot.lane.b32.xlu0 %v707, 127
    %v743 = vpop.permute.xlu0 %742
    %vm744 = vcmask 1039360
    %v745 = vsel %vm744, %v721, %v723
    %v746 = vsel %vm744, %v725, %v727
    %v747 = vsel %vm744, %v729, %v731
    %v748 = vsel %vm744, %v733, %v735
    %v749 = vsel %vm744, %v737, %v739
    %v750 = vsel %vm744, %v741, %v743
    %v763 = vmax.f32 %v696, %v745
    %v764 = vmax.f32 %v697, %v723
    %v765 = vmax.f32 %v698, %v746
    %v766 = vmax.f32 %v699, %v727
    %v767 = vmax.f32 %v700, %v747
    %v768 = vmax.f32 %v701, %v731
    %v769 = vmax.f32 %v702, %v748
    %v770 = vmax.f32 %v703, %v735
    %v771 = vmax.f32 %v704, %v749
    %v772 = vmax.f32 %v705, %v739
    %v773 = vmax.f32 %v706, %v750
    %v774 = vmax.f32 %v707, %v743
    %v775 = vld [vmem:[#allocation2] sm:$0xf]
    %v776 = vld [vmem:[#allocation2 + $0x4] sm:$0xf]
    %v777 = vld [vmem:[#allocation2 + $0x8] sm:$0xf]
    %v778 = vpack.c.bf16 %v765, %v763
    %v779 = vpack.c.bf16 %v766, %v764
    %v780 = vpack.c.bf16 %v769, %v767
    %v781 = vpack.c.bf16 %v770, %v768
    %v782 = vpack.c.bf16 %v773, %v771
    %v783 = vpack.c.bf16 %v774, %v772
    %v787 = vunpack.c.l.b16 %v775
    %v788 = vunpack.c.l.b16 %v776
    %v789 = vunpack.c.l.b16 %v777
    %v790 = vpack.c.b16 %v788, %v787
    %v791 = vpack.c.b16 %v789, %v789
    %vm792 = vcmask 375808
    %v794 = vsel %vm792, %v790, 0
    %v797 = vsel %vm792, %v791, 0
    %vm799 = vcmask 1046528
    %v801 = vsel %vm799, %v782, 0
    %v804 = vsel %vm799, %v783, 0
    %806 = vmatprep.subr.bf16.mxu0 0
    %807 = vmatpush1.bf16.msra.mxu0 0
    %808 = vmatprep.subr.bf16.mxu0 0
    %809 = vmatpush1.bf16.msra.mxu0 0
    %810 = vmatprep.subr.bf16.mxu0 0
    %811 = vmatpush1.bf16.msra.mxu0 0
    %812 = vmatprep.subr.bf16.mxu0 0
    %813 = vmatpush1.bf16.msra.mxu0 0
    %814 = vmatprep.subr.bf16.mxu0 0
    %815 = vmatpush1.bf16.msra.mxu0 0
    %816 = vmatprep.subr.bf16.mxu0 %v804
    %817 = vmatpush1.bf16.msra.mxu0 %v801
    %818 = vmatprep.subr.bf16.mxu0 %v781
    %819 = vmatpush1.bf16.msra.mxu0 %v780
    %820 = vmatprep.subr.bf16.mxu0 %v779
    %821 = vmatpush1.bf16.msra.mxu0 %v778
    %822 = vmatprep.subr.bf16.mxu0 0
    %823 = vmatpush2.bf16.msra.mxu0 0
    %824 = vmatprep.subr.bf16.mxu0 0
    %825 = vmatpush2.bf16.msra.mxu0 0
    %826 = vmatprep.subr.bf16.mxu0 0
    %827 = vmatpush2.bf16.msra.mxu0 0
    %828 = vmatprep.subr.bf16.mxu0 0
    %829 = vmatpush2.bf16.msra.mxu0 0
    %830 = vmatprep.subr.bf16.mxu0 0
    %831 = vmatpush2.bf16.msra.mxu0 0
    %832 = vmatprep.subr.bf16.mxu0 0
    %833 = vmatpush2.bf16.msra.mxu0 0
    %834 = vmatprep.subr.bf16.mxu0 0
    %835 = vmatpush2.bf16.msra.mxu0 0
    %836 = vmatprep.subr.bf16.mxu0 0
    %837 = vmatpush2.bf16.msra.mxu0 0
    %838 = vmatprep.mubr.bf16.mxu0 0
    %839 = vmatmul.mubr.bf16.gmra.mxu0 %v794
    %v840 = vpop.f32.mrf.mxu0
    %v841 = vadd.f32 0.0, %v840
    %v842 = vpop.f32.mrf.mxu0
    %v843 = vadd.f32 0.0, %v842
    %v844 = vpop.f32.mrf.mxu0
    %v845 = vadd.f32 0.0, %v844
    %v846 = vpop.f32.mrf.mxu0
    %v847 = vadd.f32 0.0, %v846
    %848 = vmatprep.mubr.bf16.mxu0 0
    %849 = vmatmul.mubr.bf16.gmra.mxu0 %v797
    %v850 = vpop.f32.mrf.mxu0
    %v851 = vadd.f32 0.0, %v850
    %v852 = vpop.f32.mrf.mxu0
    %v853 = vadd.f32 0.0, %v852
    %v854 = vpop.f32.mrf.mxu0
    %v855 = vpop.f32.mrf.mxu0
    %856 = vdwg.mxu0
    %v857 = vpack.c.bf16 %v845, %v841
    %v858 = vpack.c.bf16 %v847, %v843
    %v859 = vpack.c.bf16 %v851, %v851
    %v860 = vpack.c.bf16 %v853, %v853
    %v861 = vld [vmem:[#allocation2 + $0xc] sm:$0xf]
    %v862 = vld [vmem:[#allocation2 + $0x10] sm:$0xf]
    %v863 = vld [vmem:[#allocation2 + $0x14] sm:$0xf]
    %v864 = vld [vmem:[#allocation2 + $0x18] sm:$0xf]
    %v865 = vld [vmem:[#allocation2 + $0x1c] sm:$0xf]
    %v866 = vld [vmem:[#allocation2 + $0x20] sm:$0xf]
    %v867 = vld [vmem:[#allocation2 + $0x24] sm:$0xf]
    %v868 = vld [vmem:[#allocation2 + $0x28] sm:$0xf]
    %v869 = vld [vmem:[#allocation2 + $0x2c] sm:$0xf]
    %v870 = vld [vmem:[#allocation2 + $0x30] sm:$0xf]
    %v871 = vld [vmem:[#allocation2 + $0x34] sm:$0xf]
    %v872 = vld [vmem:[#allocation2 + $0x38] sm:$0xf]
    %v873 = vld [vmem:[#allocation2 + $0x3c] sm:$0xf]
    %v874 = vld [vmem:[#allocation2 + $0x40] sm:$0xf]
    %v875 = vld [vmem:[#allocation2 + $0x44] sm:$0xf]
    %v876 = vld [vmem:[#allocation2 + $0x48] sm:$0xf]
    %v877 = vld [vmem:[#allocation2 + $0x4c] sm:$0xf]
    %v878 = vld [vmem:[#allocation2 + $0x50] sm:$0xf]
    %v879 = vld [vmem:[#allocation2 + $0x54] sm:$0xf]
    %v880 = vld [vmem:[#allocation2 + $0x58] sm:$0xf]
    %v881 = vld [vmem:[#allocation2 + $0x5c] sm:$0xf]
    %v882 = vld [vmem:[#allocation2 + $0x60] sm:$0xf]
    %v883 = vld [vmem:[#allocation2 + $0x64] sm:$0xf]
    %v884 = vld [vmem:[#allocation2 + $0x68] sm:$0xf]
    %v885 = vld [vmem:[#allocation2 + $0x6c] sm:$0xf]
    %v886 = vld [vmem:[#allocation2 + $0x70] sm:$0xf]
    %v887 = vld [vmem:[#allocation2 + $0x74] sm:$0xf]
    %v888 = vld [vmem:[#allocation2 + $0x78] sm:$0xf]
    %v889 = vld [vmem:[#allocation2 + $0x7c] sm:$0xf]
    %v890 = vld [vmem:[#allocation2 + $0x80] sm:$0xf]
    %v891 = vld [vmem:[#allocation2 + $0x84] sm:$0xf]
    %v892 = vld [vmem:[#allocation2 + $0x88] sm:$0xf]
    %v893 = vld [vmem:[#allocation2 + $0x8c] sm:$0xf]
    %v894 = vld [vmem:[#allocation2 + $0x90] sm:$0xf]
    %v895 = vld [vmem:[#allocation2 + $0x94] sm:$0xf]
    %v896 = vld [vmem:[#allocation2 + $0x98] sm:$0xf]
    %v901 = vrot.slane %v857, 1
    %v902 = vrot.slane %v859, 1
    %v903 = vsel %vm53, %v901, %v902
    %v904 = vrot.slane %v858, 1
    %v905 = vrot.slane %v860, 1
    %v906 = vsel %vm53, %v904, %v905
    %v926 = vunpack.c.l.b16 %v879
    %v927 = vunpack.c.l.b16 %v880
    %v928 = vunpack.c.l.b16 %v881
    %v929 = vunpack.c.l.b16 %v882
    %v930 = vunpack.c.l.b16 %v883
    %v931 = vunpack.c.l.b16 %v884
    %v932 = vunpack.c.l.b16 %v885
    %v933 = vunpack.c.l.b16 %v886
    %v934 = vunpack.c.l.b16 %v887
    %v935 = vunpack.c.l.b16 %v888
    %v936 = vunpack.c.l.b16 %v889
    %v937 = vunpack.c.l.b16 %v890
    %v938 = vunpack.c.l.b16 %v891
    %v939 = vunpack.c.l.b16 %v892
    %v940 = vunpack.c.l.b16 %v893
    %v941 = vunpack.c.l.b16 %v894
    %v942 = vunpack.c.l.b16 %v895
    %v943 = vunpack.c.l.b16 %v896
    %v944 = vpack.c.b16 %v927, %v926
    %v945 = vpack.c.b16 %v929, %v928
    %v946 = vpack.c.b16 %v931, %v930
    %v947 = vpack.c.b16 %v933, %v932
    %v948 = vpack.c.b16 %v935, %v934
    %v949 = vpack.c.b16 %v937, %v936
    %v950 = vpack.c.b16 %v939, %v938
    %v951 = vpack.c.b16 %v941, %v940
    %v952 = vpack.c.b16 %v943, %v942
    %vm961 = vcmask 121856
    %v963 = vsel %vm961, %v906, 0
    %vm965 = vcmask 1047552
    %v966 = vsel %vm799, 4294967295, 65535
    %v967 = vsel %vm965, %v966, 0
    %v969 = vand.u32 %v952, %v967
    %971 = vmatprep.subr.bf16.mxu0 0
    %972 = vmatpush1.bf16.msra.mxu0 %v951
    %973 = vmatprep.subr.bf16.mxu0 0
    %974 = vmatpush1.bf16.msra.mxu0 %v950
    %975 = vmatprep.subr.bf16.mxu0 0
    %976 = vmatpush1.bf16.msra.mxu0 %v949
    %977 = vmatprep.subr.bf16.mxu0 0
    %978 = vmatpush1.bf16.msra.mxu0 %v948
    %979 = vmatprep.subr.bf16.mxu0 0
    %980 = vmatpush1.bf16.msra.mxu0 %v947
    %981 = vmatprep.subr.bf16.mxu0 0
    %982 = vmatpush1.bf16.msra.mxu0 %v946
    %983 = vmatprep.subr.bf16.mxu0 0
    %984 = vmatpush1.bf16.msra.mxu0 %v945
    %985 = vmatprep.subr.bf16.mxu0 0
    %986 = vmatpush1.bf16.msra.mxu0 %v944
    %987 = vmatprep.subr.bf16.mxu0 0
    %988 = vmatpush2.bf16.msra.mxu0 0
    %989 = vmatprep.subr.bf16.mxu0 0
    %990 = vmatpush2.bf16.msra.mxu0 0
    %991 = vmatprep.subr.bf16.mxu0 0
    %992 = vmatpush2.bf16.msra.mxu0 0
    %993 = vmatprep.subr.bf16.mxu0 0
    %994 = vmatpush2.bf16.msra.mxu0 0
    %995 = vmatprep.subr.bf16.mxu0 0
    %996 = vmatpush2.bf16.msra.mxu0 0
    %997 = vmatprep.subr.bf16.mxu0 0
    %998 = vmatpush2.bf16.msra.mxu0 0
    %999 = vmatprep.subr.bf16.mxu0 0
    %1000 = vmatpush2.bf16.msra.mxu0 0
    %1001 = vmatprep.subr.bf16.mxu0 0
    %1002 = vmatpush2.bf16.msra.mxu0 %v969
    %1003 = vmatprep.mubr.bf16.mxu0 %v963
    %1004 = vmatmul.mubr.bf16.gmra.mxu0 %v903
    %v1005 = vpop.f32.mrf.mxu0
    %v1006 = vadd.f32 0.0, %v1005
    %v1007 = vpop.f32.mrf.mxu0
    %v1008 = vpop.f32.mrf.mxu0
    %v1009 = vadd.f32 0.0, %v1008
    %v1010 = vpop.f32.mrf.mxu0
    %1011 = vdwg.mxu0
    %v1030 = vunpack.c.l.b16 %v861
    %v1031 = vunpack.c.l.b16 %v862
    %v1032 = vunpack.c.l.b16 %v863
    %v1033 = vunpack.c.l.b16 %v864
    %v1034 = vunpack.c.l.b16 %v865
    %v1035 = vunpack.c.l.b16 %v866
    %v1036 = vunpack.c.l.b16 %v867
    %v1037 = vunpack.c.l.b16 %v868
    %v1038 = vunpack.c.l.b16 %v869
    %v1039 = vunpack.c.l.b16 %v870
    %v1040 = vunpack.c.l.b16 %v871
    %v1041 = vunpack.c.l.b16 %v872
    %v1042 = vunpack.c.l.b16 %v873
    %v1043 = vunpack.c.l.b16 %v874
    %v1044 = vunpack.c.l.b16 %v875
    %v1045 = vunpack.c.l.b16 %v876
    %v1046 = vunpack.c.l.b16 %v877
    %v1047 = vunpack.c.l.b16 %v878
    %v1048 = vpack.c.b16 %v1031, %v1030
    %v1049 = vpack.c.b16 %v1033, %v1032
    %v1050 = vpack.c.b16 %v1035, %v1034
    %v1051 = vpack.c.b16 %v1037, %v1036
    %v1052 = vpack.c.b16 %v1039, %v1038
    %v1053 = vpack.c.b16 %v1041, %v1040
    %v1054 = vpack.c.b16 %v1043, %v1042
    %v1055 = vpack.c.b16 %v1045, %v1044
    %v1056 = vpack.c.b16 %v1047, %v1046
    %v1066 = vsel %vm961, %v858, 0
    %v1069 = vand.u32 %v1056, %v967
    %1071 = vmatprep.subr.bf16.mxu0 0
    %1072 = vmatpush1.bf16.msra.mxu0 %v1055
    %1073 = vmatprep.subr.bf16.mxu0 0
    %1074 = vmatpush1.bf16.msra.mxu0 %v1054
    %1075 = vmatprep.subr.bf16.mxu0 0
    %1076 = vmatpush1.bf16.msra.mxu0 %v1053
    %1077 = vmatprep.subr.bf16.mxu0 0
    %1078 = vmatpush1.bf16.msra.mxu0 %v1052
    %1079 = vmatprep.subr.bf16.mxu0 0
    %1080 = vmatpush1.bf16.msra.mxu0 %v1051
    %1081 = vmatprep.subr.bf16.mxu0 0
    %1082 = vmatpush1.bf16.msra.mxu0 %v1050
    %1083 = vmatprep.subr.bf16.mxu0 0
    %1084 = vmatpush1.bf16.msra.mxu0 %v1049
    %1085 = vmatprep.subr.bf16.mxu0 0
    %1086 = vmatpush1.bf16.msra.mxu0 %v1048
    %1087 = vmatprep.subr.bf16.mxu0 0
    %1088 = vmatpush2.bf16.msra.mxu0 0
    %1089 = vmatprep.subr.bf16.mxu0 0
    %1090 = vmatpush2.bf16.msra.mxu0 0
    %1091 = vmatprep.subr.bf16.mxu0 0
    %1092 = vmatpush2.bf16.msra.mxu0 0
    %1093 = vmatprep.subr.bf16.mxu0 0
    %1094 = vmatpush2.bf16.msra.mxu0 0
    %1095 = vmatprep.subr.bf16.mxu0 0
    %1096 = vmatpush2.bf16.msra.mxu0 0
    %1097 = vmatprep.subr.bf16.mxu0 0
    %1098 = vmatpush2.bf16.msra.mxu0 0
    %1099 = vmatprep.subr.bf16.mxu0 0
    %1100 = vmatpush2.bf16.msra.mxu0 0
    %1101 = vmatprep.subr.bf16.mxu0 0
    %1102 = vmatpush2.bf16.msra.mxu0 %v1069
    %1103 = vmatprep.mubr.bf16.mxu0 %v1066
    %1104 = vmatmul.mubr.bf16.gmra.mxu0 %v857
    %v1105 = vpop.f32.mrf.mxu0
    %v1106 = vadd.f32 %v1006, %v1105
    %v1107 = vpop.f32.mrf.mxu0
    %v1108 = vpop.f32.mrf.mxu0
    %v1109 = vadd.f32 %v1009, %v1108
    %v1110 = vpop.f32.mrf.mxu0
    %1111 = vdwg.mxu0
    %v1112 = vld [vmem:[#allocation2 + $0x9c] sm:$0xf]
    %v1113 = vld [vmem:[#allocation2 + $0xa0] sm:$0xf]
    %v1114 = vld [vmem:[#allocation2 + $0xa4] sm:$0xf]
    %v1115 = vld [vmem:[#allocation2 + $0xa8] sm:$0xf]
    %v1116 = vld [vmem:[#allocation2 + $0xac] sm:$0xf]
    %v1117 = vld [vmem:[#allocation2 + $0xb0] sm:$0xf]
    %v1118 = vld [vmem:[#allocation2 + $0xb4] sm:$0xf]
    %v1119 = vld [vmem:[#allocation2 + $0xb8] sm:$0xf]
    %v1120 = vld [vmem:[#allocation2 + $0xbc] sm:$0xf]
    %v1121 = vld [vmem:[#allocation2 + $0xc0] sm:$0xf]
    %v1122 = vld [vmem:[#allocation2 + $0xc4] sm:$0xf]
    %v1123 = vld [vmem:[#allocation2 + $0xc8] sm:$0xf]
    %v1124 = vld [vmem:[#allocation2 + $0xcc] sm:$0xf]
    %v1125 = vld [vmem:[#allocation2 + $0xd0] sm:$0xf]
    %v1126 = vld [vmem:[#allocation2 + $0xd4] sm:$0xf]
    %v1127 = vld [vmem:[#allocation2 + $0xd8] sm:$0xf]
    %v1128 = vld [vmem:[#allocation2 + $0xdc] sm:$0xf]
    %v1129 = vld [vmem:[#allocation2 + $0xe0] sm:$0xf]
    %v1130 = vrot.slane %v857, 2
    %v1131 = vrot.slane %v859, 2
    %v1132 = vsel %vm259, %v1130, %v1131
    %v1133 = vrot.slane %v858, 2
    %v1134 = vrot.slane %v860, 2
    %v1135 = vsel %vm259, %v1133, %v1134
    %v1155 = vunpack.c.l.b16 %v1112
    %v1156 = vunpack.c.l.b16 %v1113
    %v1157 = vunpack.c.l.b16 %v1114
    %v1158 = vunpack.c.l.b16 %v1115
    %v1159 = vunpack.c.l.b16 %v1116
    %v1160 = vunpack.c.l.b16 %v1117
    %v1161 = vunpack.c.l.b16 %v1118
    %v1162 = vunpack.c.l.b16 %v1119
    %v1163 = vunpack.c.l.b16 %v1120
    %v1164 = vunpack.c.l.b16 %v1121
    %v1165 = vunpack.c.l.b16 %v1122
    %v1166 = vunpack.c.l.b16 %v1123
    %v1167 = vunpack.c.l.b16 %v1124
    %v1168 = vunpack.c.l.b16 %v1125
    %v1169 = vunpack.c.l.b16 %v1126
    %v1170 = vunpack.c.l.b16 %v1127
    %v1171 = vunpack.c.l.b16 %v1128
    %v1172 = vunpack.c.l.b16 %v1129
    %v1173 = vpack.c.b16 %v1156, %v1155
    %v1174 = vpack.c.b16 %v1158, %v1157
    %v1175 = vpack.c.b16 %v1160, %v1159
    %v1176 = vpack.c.b16 %v1162, %v1161
    %v1177 = vpack.c.b16 %v1164, %v1163
    %v1178 = vpack.c.b16 %v1166, %v1165
    %v1179 = vpack.c.b16 %v1168, %v1167
    %v1180 = vpack.c.b16 %v1170, %v1169
    %v1181 = vpack.c.b16 %v1172, %v1171
    %v1191 = vsel %vm961, %v1135, 0
    %v1194 = vand.u32 %v1181, %v967
    %1196 = vmatprep.subr.bf16.mxu0 0
    %1197 = vmatpush1.bf16.msra.mxu0 %v1180
    %1198 = vmatprep.subr.bf16.mxu0 0
    %1199 = vmatpush1.bf16.msra.mxu0 %v1179
    %1200 = vmatprep.subr.bf16.mxu0 0
    %1201 = vmatpush1.bf16.msra.mxu0 %v1178
    %1202 = vmatprep.subr.bf16.mxu0 0
    %1203 = vmatpush1.bf16.msra.mxu0 %v1177
    %1204 = vmatprep.subr.bf16.mxu0 0
    %1205 = vmatpush1.bf16.msra.mxu0 %v1176
    %1206 = vmatprep.subr.bf16.mxu0 0
    %1207 = vmatpush1.bf16.msra.mxu0 %v1175
    %1208 = vmatprep.subr.bf16.mxu0 0
    %1209 = vmatpush1.bf16.msra.mxu0 %v1174
    %1210 = vmatprep.subr.bf16.mxu0 0
    %1211 = vmatpush1.bf16.msra.mxu0 %v1173
    %1212 = vmatprep.subr.bf16.mxu0 0
    %1213 = vmatpush2.bf16.msra.mxu0 0
    %1214 = vmatprep.subr.bf16.mxu0 0
    %1215 = vmatpush2.bf16.msra.mxu0 0
    %1216 = vmatprep.subr.bf16.mxu0 0
    %1217 = vmatpush2.bf16.msra.mxu0 0
    %1218 = vmatprep.subr.bf16.mxu0 0
    %1219 = vmatpush2.bf16.msra.mxu0 0
    %1220 = vmatprep.subr.bf16.mxu0 0
    %1221 = vmatpush2.bf16.msra.mxu0 0
    %1222 = vmatprep.subr.bf16.mxu0 0
    %1223 = vmatpush2.bf16.msra.mxu0 0
    %1224 = vmatprep.subr.bf16.mxu0 0
    %1225 = vmatpush2.bf16.msra.mxu0 0
    %1226 = vmatprep.subr.bf16.mxu0 0
    %1227 = vmatpush2.bf16.msra.mxu0 %v1194
    %1228 = vmatprep.mubr.bf16.mxu0 %v1191
    %1229 = vmatmul.mubr.bf16.gmra.mxu0 %v1132
    %v1230 = vpop.f32.mrf.mxu0
    %v1231 = vadd.f32 0.0, %v1230
    %v1232 = vpop.f32.mrf.mxu0
    %v1233 = vpop.f32.mrf.mxu0
    %v1234 = vadd.f32 0.0, %v1233
    %v1235 = vpop.f32.mrf.mxu0
    %1236 = vdwg.mxu0
    %v1237 = vadd.f32 %v1106, %v1231
    %v1238 = vadd.f32 %v1109, %v1234
    %v1239 = vld [vmem:[#allocation2 + $0xe4] sm:$0xf]
    %v1240 = vld [vmem:[#allocation2 + $0xe8] sm:$0xf]
    %v1241 = vld [vmem:[#allocation2 + $0xec] sm:$0xf]
    %v1242 = vld [vmem:[#allocation2 + $0xf0] sm:$0xf]
    %v1243 = vld [vmem:[#allocation2 + $0xf4] sm:$0xf]
    %v1244 = vld [vmem:[#allocation2 + $0xf8] sm:$0xf]
    %v1245 = vld [vmem:[#allocation2 + $0xfc] sm:$0xf]
    %v1246 = vld [vmem:[#allocation2 + $0x100] sm:$0xf]
    %v1247 = vld [vmem:[#allocation2 + $0x104] sm:$0xf]
    %v1248 = vld [vmem:[#allocation2 + $0x108] sm:$0xf]
    %v1249 = vld [vmem:[#allocation2 + $0x10c] sm:$0xf]
    %v1250 = vld [vmem:[#allocation2 + $0x110] sm:$0xf]
    %v1251 = vld [vmem:[#allocation2 + $0x114] sm:$0xf]
    %v1252 = vld [vmem:[#allocation2 + $0x118] sm:$0xf]
    %v1253 = vld [vmem:[#allocation2 + $0x11c] sm:$0xf]
    %v1254 = vld [vmem:[#allocation2 + $0x120] sm:$0xf]
    %v1255 = vld [vmem:[#allocation2 + $0x124] sm:$0xf]
    %v1256 = vld [vmem:[#allocation2 + $0x128] sm:$0xf]
    %v1257 = vrot.slane %v857, 3
    %v1258 = vrot.slane %v859, 3
    %v1259 = vsel %vm379, %v1257, %v1258
    %v1260 = vrot.slane %v858, 3
    %v1261 = vrot.slane %v860, 3
    %v1262 = vsel %vm379, %v1260, %v1261
    %v1282 = vunpack.c.l.b16 %v1239
    %v1283 = vunpack.c.l.b16 %v1240
    %v1284 = vunpack.c.l.b16 %v1241
    %v1285 = vunpack.c.l.b16 %v1242
    %v1286 = vunpack.c.l.b16 %v1243
    %v1287 = vunpack.c.l.b16 %v1244
    %v1288 = vunpack.c.l.b16 %v1245
    %v1289 = vunpack.c.l.b16 %v1246
    %v1290 = vunpack.c.l.b16 %v1247
    %v1291 = vunpack.c.l.b16 %v1248
    %v1292 = vunpack.c.l.b16 %v1249
    %v1293 = vunpack.c.l.b16 %v1250
    %v1294 = vunpack.c.l.b16 %v1251
    %v1295 = vunpack.c.l.b16 %v1252
    %v1296 = vunpack.c.l.b16 %v1253
    %v1297 = vunpack.c.l.b16 %v1254
    %v1298 = vunpack.c.l.b16 %v1255
    %v1299 = vunpack.c.l.b16 %v1256
    %v1300 = vpack.c.b16 %v1283, %v1282
    %v1301 = vpack.c.b16 %v1285, %v1284
    %v1302 = vpack.c.b16 %v1287, %v1286
    %v1303 = vpack.c.b16 %v1289, %v1288
    %v1304 = vpack.c.b16 %v1291, %v1290
    %v1305 = vpack.c.b16 %v1293, %v1292
    %v1306 = vpack.c.b16 %v1295, %v1294
    %v1307 = vpack.c.b16 %v1297, %v1296
    %v1308 = vpack.c.b16 %v1299, %v1298
    %v1318 = vsel %vm961, %v1262, 0
    %v1321 = vand.u32 %v1308, %v967
    %1323 = vmatprep.subr.bf16.mxu0 0
    %1324 = vmatpush1.bf16.msra.mxu0 %v1307
    %1325 = vmatprep.subr.bf16.mxu0 0
    %1326 = vmatpush1.bf16.msra.mxu0 %v1306
    %1327 = vmatprep.subr.bf16.mxu0 0
    %1328 = vmatpush1.bf16.msra.mxu0 %v1305
    %1329 = vmatprep.subr.bf16.mxu0 0
    %1330 = vmatpush1.bf16.msra.mxu0 %v1304
    %1331 = vmatprep.subr.bf16.mxu0 0
    %1332 = vmatpush1.bf16.msra.mxu0 %v1303
    %1333 = vmatprep.subr.bf16.mxu0 0
    %1334 = vmatpush1.bf16.msra.mxu0 %v1302
    %1335 = vmatprep.subr.bf16.mxu0 0
    %1336 = vmatpush1.bf16.msra.mxu0 %v1301
    %1337 = vmatprep.subr.bf16.mxu0 0
    %1338 = vmatpush1.bf16.msra.mxu0 %v1300
    %1339 = vmatprep.subr.bf16.mxu0 0
    %1340 = vmatpush2.bf16.msra.mxu0 0
    %1341 = vmatprep.subr.bf16.mxu0 0
    %1342 = vmatpush2.bf16.msra.mxu0 0
    %1343 = vmatprep.subr.bf16.mxu0 0
    %1344 = vmatpush2.bf16.msra.mxu0 0
    %1345 = vmatprep.subr.bf16.mxu0 0
    %1346 = vmatpush2.bf16.msra.mxu0 0
    %1347 = vmatprep.subr.bf16.mxu0 0
    %1348 = vmatpush2.bf16.msra.mxu0 0
    %1349 = vmatprep.subr.bf16.mxu0 0
    %1350 = vmatpush2.bf16.msra.mxu0 0
    %1351 = vmatprep.subr.bf16.mxu0 0
    %1352 = vmatpush2.bf16.msra.mxu0 0
    %1353 = vmatprep.subr.bf16.mxu0 0
    %1354 = vmatpush2.bf16.msra.mxu0 %v1321
    %1355 = vmatprep.mubr.bf16.mxu0 %v1318
    %1356 = vmatmul.mubr.bf16.gmra.mxu0 %v1259
    %v1357 = vpop.f32.mrf.mxu0
    %v1358 = vadd.f32 0.0, %v1357
    %v1359 = vpop.f32.mrf.mxu0
    %v1360 = vpop.f32.mrf.mxu0
    %v1361 = vadd.f32 0.0, %v1360
    %v1362 = vpop.f32.mrf.mxu0
    %1363 = vdwg.mxu0
    %v1364 = vadd.f32 %v1237, %v1358
    %v1365 = vadd.f32 %v1238, %v1361
    %v1366 = vld [vmem:[#allocation2 + $0x12c] sm:$0xf]
    %v1367 = vld [vmem:[#allocation2 + $0x130] sm:$0xf]
    %v1368 = vld [vmem:[#allocation2 + $0x134] sm:$0xf]
    %v1369 = vld [vmem:[#allocation2 + $0x138] sm:$0xf]
    %v1370 = vld [vmem:[#allocation2 + $0x13c] sm:$0xf]
    %v1371 = vld [vmem:[#allocation2 + $0x140] sm:$0xf]
    %v1372 = vld [vmem:[#allocation2 + $0x144] sm:$0xf]
    %v1373 = vld [vmem:[#allocation2 + $0x148] sm:$0xf]
    %v1374 = vld [vmem:[#allocation2 + $0x14c] sm:$0xf]
    %v1375 = vld [vmem:[#allocation2 + $0x150] sm:$0xf]
    %v1376 = vld [vmem:[#allocation2 + $0x154] sm:$0xf]
    %v1377 = vld [vmem:[#allocation2 + $0x158] sm:$0xf]
    %v1378 = vld [vmem:[#allocation2 + $0x15c] sm:$0xf]
    %v1379 = vld [vmem:[#allocation2 + $0x160] sm:$0xf]
    %v1380 = vld [vmem:[#allocation2 + $0x164] sm:$0xf]
    %v1381 = vld [vmem:[#allocation2 + $0x168] sm:$0xf]
    %v1382 = vld [vmem:[#allocation2 + $0x16c] sm:$0xf]
    %v1383 = vld [vmem:[#allocation2 + $0x170] sm:$0xf]
    %v1384 = vrot.slane %v857, 4
    %v1385 = vrot.slane %v859, 4
    %v1386 = vsel %vm499, %v1384, %v1385
    %v1387 = vrot.slane %v858, 4
    %v1388 = vrot.slane %v860, 4
    %v1389 = vsel %vm499, %v1387, %v1388
    %v1409 = vunpack.c.l.b16 %v1366
    %v1410 = vunpack.c.l.b16 %v1367
    %v1411 = vunpack.c.l.b16 %v1368
    %v1412 = vunpack.c.l.b16 %v1369
    %v1413 = vunpack.c.l.b16 %v1370
    %v1414 = vunpack.c.l.b16 %v1371
    %v1415 = vunpack.c.l.b16 %v1372
    %v1416 = vunpack.c.l.b16 %v1373
    %v1417 = vunpack.c.l.b16 %v1374
    %v1418 = vunpack.c.l.b16 %v1375
    %v1419 = vunpack.c.l.b16 %v1376
    %v1420 = vunpack.c.l.b16 %v1377
    %v1421 = vunpack.c.l.b16 %v1378
    %v1422 = vunpack.c.l.b16 %v1379
    %v1423 = vunpack.c.l.b16 %v1380
    %v1424 = vunpack.c.l.b16 %v1381
    %v1425 = vunpack.c.l.b16 %v1382
    %v1426 = vunpack.c.l.b16 %v1383
    %v1427 = vpack.c.b16 %v1410, %v1409
    %v1428 = vpack.c.b16 %v1412, %v1411
    %v1429 = vpack.c.b16 %v1414, %v1413
    %v1430 = vpack.c.b16 %v1416, %v1415
    %v1431 = vpack.c.b16 %v1418, %v1417
    %v1432 = vpack.c.b16 %v1420, %v1419
    %v1433 = vpack.c.b16 %v1422, %v1421
    %v1434 = vpack.c.b16 %v1424, %v1423
    %v1435 = vpack.c.b16 %v1426, %v1425
    %v1445 = vsel %vm961, %v1389, 0
    %v1448 = vand.u32 %v1435, %v967
    %1450 = vmatprep.subr.bf16.mxu0 0
    %1451 = vmatpush1.bf16.msra.mxu0 %v1434
    %1452 = vmatprep.subr.bf16.mxu0 0
    %1453 = vmatpush1.bf16.msra.mxu0 %v1433
    %1454 = vmatprep.subr.bf16.mxu0 0
    %1455 = vmatpush1.bf16.msra.mxu0 %v1432
    %1456 = vmatprep.subr.bf16.mxu0 0
    %1457 = vmatpush1.bf16.msra.mxu0 %v1431
    %1458 = vmatprep.subr.bf16.mxu0 0
    %1459 = vmatpush1.bf16.msra.mxu0 %v1430
    %1460 = vmatprep.subr.bf16.mxu0 0
    %1461 = vmatpush1.bf16.msra.mxu0 %v1429
    %1462 = vmatprep.subr.bf16.mxu0 0
    %1463 = vmatpush1.bf16.msra.mxu0 %v1428
    %1464 = vmatprep.subr.bf16.mxu0 0
    %1465 = vmatpush1.bf16.msra.mxu0 %v1427
    %1466 = vmatprep.subr.bf16.mxu0 0
    %1467 = vmatpush2.bf16.msra.mxu0 0
    %1468 = vmatprep.subr.bf16.mxu0 0
    %1469 = vmatpush2.bf16.msra.mxu0 0
    %1470 = vmatprep.subr.bf16.mxu0 0
    %1471 = vmatpush2.bf16.msra.mxu0 0
    %1472 = vmatprep.subr.bf16.mxu0 0
    %1473 = vmatpush2.bf16.msra.mxu0 0
    %1474 = vmatprep.subr.bf16.mxu0 0
    %1475 = vmatpush2.bf16.msra.mxu0 0
    %1476 = vmatprep.subr.bf16.mxu0 0
    %1477 = vmatpush2.bf16.msra.mxu0 0
    %1478 = vmatprep.subr.bf16.mxu0 0
    %1479 = vmatpush2.bf16.msra.mxu0 0
    %1480 = vmatprep.subr.bf16.mxu0 0
    %1481 = vmatpush2.bf16.msra.mxu0 %v1448
    %1482 = vmatprep.mubr.bf16.mxu0 %v1445
    %1483 = vmatmul.mubr.bf16.gmra.mxu0 %v1386
    %v1484 = vpop.f32.mrf.mxu0
    %v1485 = vadd.f32 0.0, %v1484
    %v1486 = vpop.f32.mrf.mxu0
    %v1487 = vpop.f32.mrf.mxu0
    %v1488 = vadd.f32 0.0, %v1487
    %v1489 = vpop.f32.mrf.mxu0
    %1490 = vdwg.mxu0
    %v1491 = vadd.f32 %v1364, %v1485
    %v1492 = vadd.f32 %v1365, %v1488
    %v1493 = vld [vmem:[#allocation2 + $0x174] sm:$0x1]
    %v1494 = vunpack.c.l.bf16 %v1493
    %v1495 = vlaneseq
    %v1496 = vshrl.u32 %v1495, 7
    %v1497 = vsub.s32 0, %v1496
    %v1498 = vrot.slane %v1494, %v1497
    %v1499 = vadd.f32 %v1491, %v1498
    %v1500 = vadd.f32 %v1492, %v1498
    %v1501 = vmax.f32 %v1499, 0.0
    %v1502 = vmax.f32 %v1500, 0.0
    %v1505 = vrot.slane %v1501, 2
    %v1506 = vrot.slane %v1502, 2
    %v1507 = vsel %vm89, %v1505, %v1506
    %v1510 = vmax.f32 %v1501, %v1507
    %v1511 = vmax.f32 %v1502, %v1506
    %1514 = vrot.lane.b32.xlu0 %v1510, 127
    %v1515 = vpop.permute.xlu0 %1514
    %1516 = vrot.lane.b32.xlu0 %v1511, 127
    %v1517 = vpop.permute.xlu0 %1516
    %v1520 = vmax.f32 %v1510, %v1515
    %v1521 = vmax.f32 %v1511, %v1517
    %v1522 = vpack.c.bf16 %v1521, %v1520
    %v1523 = vld [vmem:[#allocation2 + $0x178] sm:$0xf]
    %v1524 = vld [vmem:[#allocation2 + $0x17c] sm:$0xf]
    %v1525 = vld [vmem:[#allocation2 + $0x180] sm:$0xf]
    %v1526 = vld [vmem:[#allocation2 + $0x184] sm:$0xf]
    %v1527 = vld [vmem:[#allocation2 + $0x188] sm:$0xf]
    %v1528 = vld [vmem:[#allocation2 + $0x18c] sm:$0xf]
    %v1529 = vld [vmem:[#allocation2 + $0x190] sm:$0xf]
    %v1530 = vld [vmem:[#allocation2 + $0x194] sm:$0xf]
    %v1531 = vld [vmem:[#allocation2 + $0x198] sm:$0xf]
    %v1532 = vld [vmem:[#allocation2 + $0x19c] sm:$0xf]
    %v1533 = vld [vmem:[#allocation2 + $0x1a0] sm:$0xf]
    %v1534 = vld [vmem:[#allocation2 + $0x1a4] sm:$0xf]
    %v1535 = vld [vmem:[#allocation2 + $0x1a8] sm:$0xf]
    %v1536 = vld [vmem:[#allocation2 + $0x1ac] sm:$0xf]
    %v1537 = vld [vmem:[#allocation2 + $0x1b0] sm:$0xf]
    %v1538 = vld [vmem:[#allocation2 + $0x1b4] sm:$0xf]
    %v1539 = vld [vmem:[#allocation2 + $0x1b8] sm:$0xf]
    %v1540 = vld [vmem:[#allocation2 + $0x1bc] sm:$0xf]
    %v1541 = vld [vmem:[#allocation2 + $0x1c0] sm:$0xf]
    %v1542 = vld [vmem:[#allocation2 + $0x1c4] sm:$0xf]
    %v1543 = vld [vmem:[#allocation2 + $0x1c8] sm:$0xf]
    %v1544 = vld [vmem:[#allocation2 + $0x1cc] sm:$0xf]
    %v1545 = vld [vmem:[#allocation2 + $0x1d0] sm:$0xf]
    %v1546 = vld [vmem:[#allocation2 + $0x1d4] sm:$0xf]
    %v1547 = vld [vmem:[#allocation2 + $0x1d8] sm:$0xf]
    %v1548 = vld [vmem:[#allocation2 + $0x1dc] sm:$0xf]
    %v1549 = vld [vmem:[#allocation2 + $0x1e0] sm:$0xf]
    %v1550 = vld [vmem:[#allocation2 + $0x1e4] sm:$0xf]
    %v1551 = vld [vmem:[#allocation2 + $0x1e8] sm:$0xf]
    %v1552 = vld [vmem:[#allocation2 + $0x1ec] sm:$0xf]
    %v1553 = vld [vmem:[#allocation2 + $0x1f0] sm:$0xf]
    %v1554 = vld [vmem:[#allocation2 + $0x1f4] sm:$0xf]
    %v1556 = vrot.slane %v1522, 2
    %v1573 = vunpack.c.l.b16 %v1539
    %v1574 = vunpack.c.l.b16 %v1540
    %v1575 = vunpack.c.l.b16 %v1541
    %v1576 = vunpack.c.l.b16 %v1542
    %v1577 = vunpack.c.l.b16 %v1543
    %v1578 = vunpack.c.l.b16 %v1544
    %v1579 = vunpack.c.l.b16 %v1545
    %v1580 = vunpack.c.l.b16 %v1546
    %v1581 = vunpack.c.l.b16 %v1547
    %v1582 = vunpack.c.l.b16 %v1548
    %v1583 = vunpack.c.l.b16 %v1549
    %v1584 = vunpack.c.l.b16 %v1550
    %v1585 = vunpack.c.l.b16 %v1551
    %v1586 = vunpack.c.l.b16 %v1552
    %v1587 = vunpack.c.l.b16 %v1553
    %v1588 = vunpack.c.l.b16 %v1554
    %v1589 = vpack.c.b16 %v1574, %v1573
    %v1590 = vpack.c.b16 %v1576, %v1575
    %v1591 = vpack.c.b16 %v1578, %v1577
    %v1592 = vpack.c.b16 %v1580, %v1579
    %v1593 = vpack.c.b16 %v1582, %v1581
    %v1594 = vpack.c.b16 %v1584, %v1583
    %v1595 = vpack.c.b16 %v1586, %v1585
    %v1596 = vpack.c.b16 %v1588, %v1587
    %v1605 = vsel %vm744, %v1556, 0
    %v1608 = vand.u32 %v1596, %v967
    %1610 = vmatprep.subr.bf16.mxu0 0
    %1611 = vmatpush1.bf16.msra.mxu0 %v1608
    %1612 = vmatprep.subr.bf16.mxu0 0
    %1613 = vmatpush1.bf16.msra.mxu0 %v1595
    %1614 = vmatprep.subr.bf16.mxu0 0
    %1615 = vmatpush1.bf16.msra.mxu0 %v1594
    %1616 = vmatprep.subr.bf16.mxu0 0
    %1617 = vmatpush1.bf16.msra.mxu0 %v1593
    %1618 = vmatprep.subr.bf16.mxu0 0
    %1619 = vmatpush1.bf16.msra.mxu0 %v1592
    %1620 = vmatprep.subr.bf16.mxu0 0
    %1621 = vmatpush1.bf16.msra.mxu0 %v1591
    %1622 = vmatprep.subr.bf16.mxu0 0
    %1623 = vmatpush1.bf16.msra.mxu0 %v1590
    %1624 = vmatprep.subr.bf16.mxu0 0
    %1625 = vmatpush1.bf16.msra.mxu0 %v1589
    %1626 = vmatprep.subr.bf16.mxu0 0
    %1627 = vmatpush2.bf16.msra.mxu0 0
    %1628 = vmatprep.subr.bf16.mxu0 0
    %1629 = vmatpush2.bf16.msra.mxu0 0
    %1630 = vmatprep.subr.bf16.mxu0 0
    %1631 = vmatpush2.bf16.msra.mxu0 0
    %1632 = vmatprep.subr.bf16.mxu0 0
    %1633 = vmatpush2.bf16.msra.mxu0 0
    %1634 = vmatprep.subr.bf16.mxu0 0
    %1635 = vmatpush2.bf16.msra.mxu0 0
    %1636 = vmatprep.subr.bf16.mxu0 0
    %1637 = vmatpush2.bf16.msra.mxu0 0
    %1638 = vmatprep.subr.bf16.mxu0 0
    %1639 = vmatpush2.bf16.msra.mxu0 0
    %1640 = vmatprep.subr.bf16.mxu0 0
    %1641 = vmatpush2.bf16.msra.mxu0 0
    %1642 = vmatprep.mubr.bf16.mxu0 0
    %1643 = vmatmul.mubr.bf16.gmra.mxu0 %v1605
    %v1644 = vpop.f32.mrf.mxu0
    %v1645 = vadd.f32 0.0, %v1644
    %v1646 = vpop.f32.mrf.mxu0
    %v1647 = vpop.f32.mrf.mxu0
    %v1648 = vpop.f32.mrf.mxu0
    %1649 = vdwg.mxu0
    %v1666 = vunpack.c.l.b16 %v1523
    %v1667 = vunpack.c.l.b16 %v1524
    %v1668 = vunpack.c.l.b16 %v1525
    %v1669 = vunpack.c.l.b16 %v1526
    %v1670 = vunpack.c.l.b16 %v1527
    %v1671 = vunpack.c.l.b16 %v1528
    %v1672 = vunpack.c.l.b16 %v1529
    %v1673 = vunpack.c.l.b16 %v1530
    %v1674 = vunpack.c.l.b16 %v1531
    %v1675 = vunpack.c.l.b16 %v1532
    %v1676 = vunpack.c.l.b16 %v1533
    %v1677 = vunpack.c.l.b16 %v1534
    %v1678 = vunpack.c.l.b16 %v1535
    %v1679 = vunpack.c.l.b16 %v1536
    %v1680 = vunpack.c.l.b16 %v1537
    %v1681 = vunpack.c.l.b16 %v1538
    %v1682 = vpack.c.b16 %v1667, %v1666
    %v1683 = vpack.c.b16 %v1669, %v1668
    %v1684 = vpack.c.b16 %v1671, %v1670
    %v1685 = vpack.c.b16 %v1673, %v1672
    %v1686 = vpack.c.b16 %v1675, %v1674
    %v1687 = vpack.c.b16 %v1677, %v1676
    %v1688 = vpack.c.b16 %v1679, %v1678
    %v1689 = vpack.c.b16 %v1681, %v1680
    %v1698 = vsel %vm744, %v1522, 0
    %v1701 = vand.u32 %v1689, %v967
    %1703 = vmatprep.subr.bf16.mxu0 0
    %1704 = vmatpush1.bf16.msra.mxu0 %v1701
    %1705 = vmatprep.subr.bf16.mxu0 0
    %1706 = vmatpush1.bf16.msra.mxu0 %v1688
    %1707 = vmatprep.subr.bf16.mxu0 0
    %1708 = vmatpush1.bf16.msra.mxu0 %v1687
    %1709 = vmatprep.subr.bf16.mxu0 0
    %1710 = vmatpush1.bf16.msra.mxu0 %v1686
    %1711 = vmatprep.subr.bf16.mxu0 0
    %1712 = vmatpush1.bf16.msra.mxu0 %v1685
    %1713 = vmatprep.subr.bf16.mxu0 0
    %1714 = vmatpush1.bf16.msra.mxu0 %v1684
    %1715 = vmatprep.subr.bf16.mxu0 0
    %1716 = vmatpush1.bf16.msra.mxu0 %v1683
    %1717 = vmatprep.subr.bf16.mxu0 0
    %1718 = vmatpush1.bf16.msra.mxu0 %v1682
    %1719 = vmatprep.subr.bf16.mxu0 0
    %1720 = vmatpush2.bf16.msra.mxu0 0
    %1721 = vmatprep.subr.bf16.mxu0 0
    %1722 = vmatpush2.bf16.msra.mxu0 0
    %1723 = vmatprep.subr.bf16.mxu0 0
    %1724 = vmatpush2.bf16.msra.mxu0 0
    %1725 = vmatprep.subr.bf16.mxu0 0
    %1726 = vmatpush2.bf16.msra.mxu0 0
    %1727 = vmatprep.subr.bf16.mxu0 0
    %1728 = vmatpush2.bf16.msra.mxu0 0
    %1729 = vmatprep.subr.bf16.mxu0 0
    %1730 = vmatpush2.bf16.msra.mxu0 0
    %1731 = vmatprep.subr.bf16.mxu0 0
    %1732 = vmatpush2.bf16.msra.mxu0 0
    %1733 = vmatprep.subr.bf16.mxu0 0
    %1734 = vmatpush2.bf16.msra.mxu0 0
    %1735 = vmatprep.mubr.bf16.mxu0 0
    %1736 = vmatmul.mubr.bf16.gmra.mxu0 %v1698
    %v1737 = vpop.f32.mrf.mxu0
    %v1738 = vadd.f32 %v1645, %v1737
    %v1739 = vpop.f32.mrf.mxu0
    %v1740 = vpop.f32.mrf.mxu0
    %v1741 = vpop.f32.mrf.mxu0
    %1742 = vdwg.mxu0
    %v1743 = vld [vmem:[#allocation2 + $0x1f8] sm:$0xf]
    %v1744 = vld [vmem:[#allocation2 + $0x1fc] sm:$0xf]
    %v1745 = vld [vmem:[#allocation2 + $0x200] sm:$0xf]
    %v1746 = vld [vmem:[#allocation2 + $0x204] sm:$0xf]
    %v1747 = vld [vmem:[#allocation2 + $0x208] sm:$0xf]
    %v1748 = vld [vmem:[#allocation2 + $0x20c] sm:$0xf]
    %v1749 = vld [vmem:[#allocation2 + $0x210] sm:$0xf]
    %v1750 = vld [vmem:[#allocation2 + $0x214] sm:$0xf]
    %v1751 = vld [vmem:[#allocation2 + $0x218] sm:$0xf]
    %v1752 = vld [vmem:[#allocation2 + $0x21c] sm:$0xf]
    %v1753 = vld [vmem:[#allocation2 + $0x220] sm:$0xf]
    %v1754 = vld [vmem:[#allocation2 + $0x224] sm:$0xf]
    %v1755 = vld [vmem:[#allocation2 + $0x228] sm:$0xf]
    %v1756 = vld [vmem:[#allocation2 + $0x22c] sm:$0xf]
    %v1757 = vld [vmem:[#allocation2 + $0x230] sm:$0xf]
    %v1758 = vld [vmem:[#allocation2 + $0x234] sm:$0xf]
    %v1759 = vrot.slane %v1522, 4
    %v1776 = vunpack.c.l.b16 %v1743
    %v1777 = vunpack.c.l.b16 %v1744
    %v1778 = vunpack.c.l.b16 %v1745
    %v1779 = vunpack.c.l.b16 %v1746
    %v1780 = vunpack.c.l.b16 %v1747
    %v1781 = vunpack.c.l.b16 %v1748
    %v1782 = vunpack.c.l.b16 %v1749
    %v1783 = vunpack.c.l.b16 %v1750
    %v1784 = vunpack.c.l.b16 %v1751
    %v1785 = vunpack.c.l.b16 %v1752
    %v1786 = vunpack.c.l.b16 %v1753
    %v1787 = vunpack.c.l.b16 %v1754
    %v1788 = vunpack.c.l.b16 %v1755
    %v1789 = vunpack.c.l.b16 %v1756
    %v1790 = vunpack.c.l.b16 %v1757
    %v1791 = vunpack.c.l.b16 %v1758
    %v1792 = vpack.c.b16 %v1777, %v1776
    %v1793 = vpack.c.b16 %v1779, %v1778
    %v1794 = vpack.c.b16 %v1781, %v1780
    %v1795 = vpack.c.b16 %v1783, %v1782
    %v1796 = vpack.c.b16 %v1785, %v1784
    %v1797 = vpack.c.b16 %v1787, %v1786
    %v1798 = vpack.c.b16 %v1789, %v1788
    %v1799 = vpack.c.b16 %v1791, %v1790
    %v1808 = vsel %vm744, %v1759, 0
    %v1811 = vand.u32 %v1799, %v967
    %1813 = vmatprep.subr.bf16.mxu0 0
    %1814 = vmatpush1.bf16.msra.mxu0 %v1811
    %1815 = vmatprep.subr.bf16.mxu0 0
    %1816 = vmatpush1.bf16.msra.mxu0 %v1798
    %1817 = vmatprep.subr.bf16.mxu0 0
    %1818 = vmatpush1.bf16.msra.mxu0 %v1797
    %1819 = vmatprep.subr.bf16.mxu0 0
    %1820 = vmatpush1.bf16.msra.mxu0 %v1796
    %1821 = vmatprep.subr.bf16.mxu0 0
    %1822 = vmatpush1.bf16.msra.mxu0 %v1795
    %1823 = vmatprep.subr.bf16.mxu0 0
    %1824 = vmatpush1.bf16.msra.mxu0 %v1794
    %1825 = vmatprep.subr.bf16.mxu0 0
    %1826 = vmatpush1.bf16.msra.mxu0 %v1793
    %1827 = vmatprep.subr.bf16.mxu0 0
    %1828 = vmatpush1.bf16.msra.mxu0 %v1792
    %1829 = vmatprep.subr.bf16.mxu0 0
    %1830 = vmatpush2.bf16.msra.mxu0 0
    %1831 = vmatprep.subr.bf16.mxu0 0
    %1832 = vmatpush2.bf16.msra.mxu0 0
    %1833 = vmatprep.subr.bf16.mxu0 0
    %1834 = vmatpush2.bf16.msra.mxu0 0
    %1835 = vmatprep.subr.bf16.mxu0 0
    %1836 = vmatpush2.bf16.msra.mxu0 0
    %1837 = vmatprep.subr.bf16.mxu0 0
    %1838 = vmatpush2.bf16.msra.mxu0 0
    %1839 = vmatprep.subr.bf16.mxu0 0
    %1840 = vmatpush2.bf16.msra.mxu0 0
    %1841 = vmatprep.subr.bf16.mxu0 0
    %1842 = vmatpush2.bf16.msra.mxu0 0
    %1843 = vmatprep.subr.bf16.mxu0 0
    %1844 = vmatpush2.bf16.msra.mxu0 0
    %1845 = vmatprep.mubr.bf16.mxu0 0
    %1846 = vmatmul.mubr.bf16.gmra.mxu0 %v1808
    %v1847 = vpop.f32.mrf.mxu0
    %v1848 = vadd.f32 0.0, %v1847
    %v1849 = vpop.f32.mrf.mxu0
    %v1850 = vpop.f32.mrf.mxu0
    %v1851 = vpop.f32.mrf.mxu0
    %1852 = vdwg.mxu0
    %v1853 = vadd.f32 %v1738, %v1848
    %v1854 = vld [vmem:[#allocation2 + $0x238] sm:$0xf]
    %v1855 = vld [vmem:[#allocation2 + $0x23c] sm:$0xf]
    %v1856 = vld [vmem:[#allocation2 + $0x240] sm:$0xf]
    %v1857 = vld [vmem:[#allocation2 + $0x244] sm:$0xf]
    %v1858 = vld [vmem:[#allocation2 + $0x248] sm:$0xf]
    %v1859 = vld [vmem:[#allocation2 + $0x24c] sm:$0xf]
    %v1860 = vld [vmem:[#allocation2 + $0x250] sm:$0xf]
    %v1861 = vld [vmem:[#allocation2 + $0x254] sm:$0xf]
    %v1862 = vld [vmem:[#allocation2 + $0x258] sm:$0xf]
    %v1863 = vld [vmem:[#allocation2 + $0x25c] sm:$0xf]
    %v1864 = vld [vmem:[#allocation2 + $0x260] sm:$0xf]
    %v1865 = vld [vmem:[#allocation2 + $0x264] sm:$0xf]
    %v1866 = vld [vmem:[#allocation2 + $0x268] sm:$0xf]
    %v1867 = vld [vmem:[#allocation2 + $0x26c] sm:$0xf]
    %v1868 = vld [vmem:[#allocation2 + $0x270] sm:$0xf]
    %v1869 = vld [vmem:[#allocation2 + $0x274] sm:$0xf]
    %v1870 = vrot.slane %v1522, 6
    %v1887 = vunpack.c.l.b16 %v1854
    %v1888 = vunpack.c.l.b16 %v1855
    %v1889 = vunpack.c.l.b16 %v1856
    %v1890 = vunpack.c.l.b16 %v1857
    %v1891 = vunpack.c.l.b16 %v1858
    %v1892 = vunpack.c.l.b16 %v1859
    %v1893 = vunpack.c.l.b16 %v1860
    %v1894 = vunpack.c.l.b16 %v1861
    %v1895 = vunpack.c.l.b16 %v1862
    %v1896 = vunpack.c.l.b16 %v1863
    %v1897 = vunpack.c.l.b16 %v1864
    %v1898 = vunpack.c.l.b16 %v1865
    %v1899 = vunpack.c.l.b16 %v1866
    %v1900 = vunpack.c.l.b16 %v1867
    %v1901 = vunpack.c.l.b16 %v1868
    %v1902 = vunpack.c.l.b16 %v1869
    %v1903 = vpack.c.b16 %v1888, %v1887
    %v1904 = vpack.c.b16 %v1890, %v1889
    %v1905 = vpack.c.b16 %v1892, %v1891
    %v1906 = vpack.c.b16 %v1894, %v1893
    %v1907 = vpack.c.b16 %v1896, %v1895
    %v1908 = vpack.c.b16 %v1898, %v1897
    %v1909 = vpack.c.b16 %v1900, %v1899
    %v1910 = vpack.c.b16 %v1902, %v1901
    %v1919 = vsel %vm744, %v1870, 0
    %v1922 = vand.u32 %v1910, %v967
    %1924 = vmatprep.subr.bf16.mxu0 0
    %1925 = vmatpush1.bf16.msra.mxu0 %v1922
    %1926 = vmatprep.subr.bf16.mxu0 0
    %1927 = vmatpush1.bf16.msra.mxu0 %v1909
    %1928 = vmatprep.subr.bf16.mxu0 0
    %1929 = vmatpush1.bf16.msra.mxu0 %v1908
    %1930 = vmatprep.subr.bf16.mxu0 0
    %1931 = vmatpush1.bf16.msra.mxu0 %v1907
    %1932 = vmatprep.subr.bf16.mxu0 0
    %1933 = vmatpush1.bf16.msra.mxu0 %v1906
    %1934 = vmatprep.subr.bf16.mxu0 0
    %1935 = vmatpush1.bf16.msra.mxu0 %v1905
    %1936 = vmatprep.subr.bf16.mxu0 0
    %1937 = vmatpush1.bf16.msra.mxu0 %v1904
    %1938 = vmatprep.subr.bf16.mxu0 0
    %1939 = vmatpush1.bf16.msra.mxu0 %v1903
    %1940 = vmatprep.subr.bf16.mxu0 0
    %1941 = vmatpush2.bf16.msra.mxu0 0
    %1942 = vmatprep.subr.bf16.mxu0 0
    %1943 = vmatpush2.bf16.msra.mxu0 0
    %1944 = vmatprep.subr.bf16.mxu0 0
    %1945 = vmatpush2.bf16.msra.mxu0 0
    %1946 = vmatprep.subr.bf16.mxu0 0
    %1947 = vmatpush2.bf16.msra.mxu0 0
    %1948 = vmatprep.subr.bf16.mxu0 0
    %1949 = vmatpush2.bf16.msra.mxu0 0
    %1950 = vmatprep.subr.bf16.mxu0 0
    %1951 = vmatpush2.bf16.msra.mxu0 0
    %1952 = vmatprep.subr.bf16.mxu0 0
    %1953 = vmatpush2.bf16.msra.mxu0 0
    %1954 = vmatprep.subr.bf16.mxu0 0
    %1955 = vmatpush2.bf16.msra.mxu0 0
    %1956 = vmatprep.mubr.bf16.mxu0 0
    %1957 = vmatmul.mubr.bf16.gmra.mxu0 %v1919
    %v1958 = vpop.f32.mrf.mxu0
    %v1959 = vadd.f32 0.0, %v1958
    %v1960 = vpop.f32.mrf.mxu0
    %v1961 = vpop.f32.mrf.mxu0
    %v1962 = vpop.f32.mrf.mxu0
    %1963 = vdwg.mxu0
    %v1964 = vadd.f32 %v1853, %v1959
    %v1965 = vld [vmem:[#allocation2 + $0x278] sm:$0x1]
    %v1966 = vunpack.c.l.bf16 %v1965
    %v1967 = vlaneseq
    %v1968 = vshrl.u32 %v1967, 7
    %v1969 = vsub.s32 0, %v1968
    %v1970 = vrot.slane %v1966, %v1969
    %v1971 = vadd.f32 %v1964, %v1970
    %v1972 = vmax.f32 %v1971, 0.0
    %v1973 = vpack.c.bf16 %v1972, %v1972
    %v1974 = vld [vmem:[#allocation2 + $0x27c] sm:$0xf]
    %v1975 = vld [vmem:[#allocation2 + $0x280] sm:$0xf]
    %v1976 = vld [vmem:[#allocation2 + $0x284] sm:$0xf]
    %v1977 = vld [vmem:[#allocation2 + $0x288] sm:$0xf]
    %v1978 = vld [vmem:[#allocation2 + $0x28c] sm:$0xf]
    %v1979 = vld [vmem:[#allocation2 + $0x290] sm:$0xf]
    %v1980 = vld [vmem:[#allocation2 + $0x294] sm:$0xf]
    %v1981 = vld [vmem:[#allocation2 + $0x298] sm:$0xf]
    %v1982 = vld [vmem:[#allocation2 + $0x29c] sm:$0xf]
    %v1983 = vld [vmem:[#allocation2 + $0x2a0] sm:$0xf]
    %v1984 = vld [vmem:[#allocation2 + $0x2a4] sm:$0xf]
    %v1985 = vld [vmem:[#allocation2 + $0x2a8] sm:$0xf]
    %v1986 = vld [vmem:[#allocation2 + $0x2ac] sm:$0xf]
    %v1987 = vld [vmem:[#allocation2 + $0x2b0] sm:$0xf]
    %v1988 = vld [vmem:[#allocation2 + $0x2b4] sm:$0xf]
    %v1989 = vld [vmem:[#allocation2 + $0x2b8] sm:$0xf]
    %v1990 = vld [vmem:[#allocation2 + $0x2bc] sm:$0x1]
    %v1991 = vunpack.c.l.bf16 %v1990
    %v1992 = vlaneseq
    %v1993 = vshrl.u32 %v1992, 7
    %v1994 = vsub.s32 0, %v1993
    %v1995 = vrot.slane %v1991, %v1994
    %v2012 = vunpack.c.l.b16 %v1974
    %v2013 = vunpack.c.l.b16 %v1975
    %v2014 = vunpack.c.l.b16 %v1976
    %v2015 = vunpack.c.l.b16 %v1977
    %v2016 = vunpack.c.l.b16 %v1978
    %v2017 = vunpack.c.l.b16 %v1979
    %v2018 = vunpack.c.l.b16 %v1980
    %v2019 = vunpack.c.l.b16 %v1981
    %v2020 = vunpack.c.l.b16 %v1982
    %v2021 = vunpack.c.l.b16 %v1983
    %v2022 = vunpack.c.l.b16 %v1984
    %v2023 = vunpack.c.l.b16 %v1985
    %v2024 = vunpack.c.l.b16 %v1986
    %v2025 = vunpack.c.l.b16 %v1987
    %v2026 = vunpack.c.l.b16 %v1988
    %v2027 = vunpack.c.l.b16 %v1989
    %v2028 = vpack.c.b16 %v2013, %v2012
    %v2029 = vpack.c.b16 %v2015, %v2014
    %v2030 = vpack.c.b16 %v2017, %v2016
    %v2031 = vpack.c.b16 %v2019, %v2018
    %v2032 = vpack.c.b16 %v2021, %v2020
    %v2033 = vpack.c.b16 %v2023, %v2022
    %v2034 = vpack.c.b16 %v2025, %v2024
    %v2035 = vpack.c.b16 %v2027, %v2026
    %2044 = vmatprep.subr.bf16.mxu0 0
    %2045 = vmatpush1.bf16.msra.mxu0 %v2035
    %2046 = vmatprep.subr.bf16.mxu0 0
    %2047 = vmatpush1.bf16.msra.mxu0 %v2034
    %2048 = vmatprep.subr.bf16.mxu0 0
    %2049 = vmatpush1.bf16.msra.mxu0 %v2033
    %2050 = vmatprep.subr.bf16.mxu0 0
    %2051 = vmatpush1.bf16.msra.mxu0 %v2032
    %2052 = vmatprep.subr.bf16.mxu0 0
    %2053 = vmatpush1.bf16.msra.mxu0 %v2031
    %2054 = vmatprep.subr.bf16.mxu0 0
    %2055 = vmatpush1.bf16.msra.mxu0 %v2030
    %2056 = vmatprep.subr.bf16.mxu0 0
    %2057 = vmatpush1.bf16.msra.mxu0 %v2029
    %2058 = vmatprep.subr.bf16.mxu0 0
    %2059 = vmatpush1.bf16.msra.mxu0 %v2028
    %2060 = vmatprep.subr.bf16.mxu0 0
    %2061 = vmatpush2.bf16.msra.mxu0 0
    %2062 = vmatprep.subr.bf16.mxu0 0
    %2063 = vmatpush2.bf16.msra.mxu0 0
    %2064 = vmatprep.subr.bf16.mxu0 0
    %2065 = vmatpush2.bf16.msra.mxu0 0
    %2066 = vmatprep.subr.bf16.mxu0 0
    %2067 = vmatpush2.bf16.msra.mxu0 0
    %2068 = vmatprep.subr.bf16.mxu0 0
    %2069 = vmatpush2.bf16.msra.mxu0 0
    %2070 = vmatprep.subr.bf16.mxu0 0
    %2071 = vmatpush2.bf16.msra.mxu0 0
    %2072 = vmatprep.subr.bf16.mxu0 0
    %2073 = vmatpush2.bf16.msra.mxu0 0
    %2074 = vmatprep.subr.bf16.mxu0 0
    %2075 = vmatpush2.bf16.msra.mxu0 0
    %2076 = vmatprep.mubr.bf16.mxu0 0
    %2077 = vmatmul.mubr.bf16.gmra.mxu0 %v1973
    %v2078 = vpop.f32.mrf.mxu0
    %v2079 = vadd.f32 %v1995, %v2078
    %v2080 = vpop.f32.mrf.mxu0
    %v2081 = vpop.f32.mrf.mxu0
    %v2082 = vpop.f32.mrf.mxu0
    %2083 = vdwg.mxu0
    %v2084 = vmax.f32 %v2079, 0.0
    %v2085 = vpack.c.bf16 %v2084, %v2084
    %v2086 = vld [vmem:[#allocation2 + $0x2c0] sm:$0xf]
    %v2087 = vld [vmem:[#allocation2 + $0x2c4] sm:$0xf]
    %v2088 = vld [vmem:[#allocation2 + $0x2c8] sm:$0xf]
    %v2089 = vld [vmem:[#allocation2 + $0x2cc] sm:$0xf]
    %v2090 = vld [vmem:[#allocation2 + $0x2d0] sm:$0xf]
    %v2091 = vld [vmem:[#allocation2 + $0x2d4] sm:$0xf]
    %v2092 = vld [vmem:[#allocation2 + $0x2d8] sm:$0xf]
    %v2093 = vld [vmem:[#allocation2 + $0x2dc] sm:$0xf]
    %v2094 = vld [vmem:[#allocation2 + $0x2e0] sm:$0xf]
    %v2095 = vld [vmem:[#allocation2 + $0x2e4] sm:$0xf]
    %v2096 = vld [vmem:[#allocation2 + $0x2e8] sm:$0xf]
    %v2097 = vld [vmem:[#allocation2 + $0x2ec] sm:$0xf]
    %v2098 = vld [vmem:[#allocation2 + $0x2f0] sm:$0xf]
    %v2099 = vld [vmem:[#allocation2 + $0x2f4] sm:$0xf]
    %v2100 = vld [vmem:[#allocation2 + $0x2f8] sm:$0xf]
    %v2101 = vld [vmem:[#allocation2 + $0x2fc] sm:$0xf]
    %v2102 = vld [vmem:[#allocation2 + $0x300] sm:$0x1]
    %v2103 = vunpack.c.l.bf16 %v2102
    %v2104 = vlaneseq
    %v2105 = vshrl.u32 %v2104, 7
    %v2106 = vsub.s32 0, %v2105
    %v2107 = vrot.slane %v2103, %v2106
    %v2124 = vunpack.c.l.b16 %v2086
    %v2125 = vunpack.c.l.b16 %v2087
    %v2126 = vunpack.c.l.b16 %v2088
    %v2127 = vunpack.c.l.b16 %v2089
    %v2128 = vunpack.c.l.b16 %v2090
    %v2129 = vunpack.c.l.b16 %v2091
    %v2130 = vunpack.c.l.b16 %v2092
    %v2131 = vunpack.c.l.b16 %v2093
    %v2132 = vunpack.c.l.b16 %v2094
    %v2133 = vunpack.c.l.b16 %v2095
    %v2134 = vunpack.c.l.b16 %v2096
    %v2135 = vunpack.c.l.b16 %v2097
    %v2136 = vunpack.c.l.b16 %v2098
    %v2137 = vunpack.c.l.b16 %v2099
    %v2138 = vunpack.c.l.b16 %v2100
    %v2139 = vunpack.c.l.b16 %v2101
    %v2140 = vpack.c.b16 %v2125, %v2124
    %v2141 = vpack.c.b16 %v2127, %v2126
    %v2142 = vpack.c.b16 %v2129, %v2128
    %v2143 = vpack.c.b16 %v2131, %v2130
    %v2144 = vpack.c.b16 %v2133, %v2132
    %v2145 = vpack.c.b16 %v2135, %v2134
    %v2146 = vpack.c.b16 %v2137, %v2136
    %v2147 = vpack.c.b16 %v2139, %v2138
    %2156 = vmatprep.subr.bf16.mxu0 0
    %2157 = vmatpush1.bf16.msra.mxu0 %v2147
    %2158 = vmatprep.subr.bf16.mxu0 0
    %2159 = vmatpush1.bf16.msra.mxu0 %v2146
    %2160 = vmatprep.subr.bf16.mxu0 0
    %2161 = vmatpush1.bf16.msra.mxu0 %v2145
    %2162 = vmatprep.subr.bf16.mxu0 0
    %2163 = vmatpush1.bf16.msra.mxu0 %v2144
    %2164 = vmatprep.subr.bf16.mxu0 0
    %2165 = vmatpush1.bf16.msra.mxu0 %v2143
    %2166 = vmatprep.subr.bf16.mxu0 0
    %2167 = vmatpush1.bf16.msra.mxu0 %v2142
    %2168 = vmatprep.subr.bf16.mxu0 0
    %2169 = vmatpush1.bf16.msra.mxu0 %v2141
    %2170 = vmatprep.subr.bf16.mxu0 0
    %2171 = vmatpush1.bf16.msra.mxu0 %v2140
    %2172 = vmatprep.subr.bf16.mxu0 0
    %2173 = vmatpush2.bf16.msra.mxu0 0
    %2174 = vmatprep.subr.bf16.mxu0 0
    %2175 = vmatpush2.bf16.msra.mxu0 0
    %2176 = vmatprep.subr.bf16.mxu0 0
    %2177 = vmatpush2.bf16.msra.mxu0 0
    %2178 = vmatprep.subr.bf16.mxu0 0
    %2179 = vmatpush2.bf16.msra.mxu0 0
    %2180 = vmatprep.subr.bf16.mxu0 0
    %2181 = vmatpush2.bf16.msra.mxu0 0
    %2182 = vmatprep.subr.bf16.mxu0 0
    %2183 = vmatpush2.bf16.msra.mxu0 0
    %2184 = vmatprep.subr.bf16.mxu0 0
    %2185 = vmatpush2.bf16.msra.mxu0 0
    %2186 = vmatprep.subr.bf16.mxu0 0
    %2187 = vmatpush2.bf16.msra.mxu0 0
    %2188 = vmatprep.mubr.bf16.mxu0 0
    %2189 = vmatmul.mubr.bf16.gmra.mxu0 %v2085
    %v2190 = vpop.f32.mrf.mxu0
    %v2191 = vadd.f32 %v2107, %v2190
    %v2192 = vpop.f32.mrf.mxu0
    %v2193 = vpop.f32.mrf.mxu0
    %v2194 = vpop.f32.mrf.mxu0
    %2195 = vdwg.mxu0
    %2196 = vst [vmem:[#allocation5] sm:$0x3] %v2191
    // Predicated region
    $region18: #{net_forward.1} parent=1 // pred_check
      _
    $region19: #{net_forward.1} parent=1 // pred_check_branch
      %2198 = sbr.rel (0) target = $region21
    $region20: #{net_forward.1} parent=1 // pred_region
      %s2200 = ssub.s32 32, 32
      %2201 = vsyncadd [#allocation4], %s2200
      %s2203 = sshll.u32 [#allocation5], 4
      %s2204 = int_to_ptr.vmem [resolvable:$true] %s2203
      %2206 = dma.vmem_to_hbm [thread:$0]  %s2204, 32, %s3, [#allocation4]
    $region21: #{net_forward.1} parent=1 // pred_fallthru
      _
    // Predicated region
    $region22: #{net_forward.1} parent=1 // pred_check
      _
    $region23: #{net_forward.1} parent=1 // pred_check_branch
      %2208 = sbr.rel (0) target = $region25
    $region24: #{net_forward.1} parent=1 // pred_region
      %2209 = dma.done [#allocation4], 32
    $region25: #{net_forward.1} parent=1 // pred_fallthru
      _
    %2210 = vsyncpa [#allocation3], 1
    %2211 = vsyncpa [#allocation4], 1

</llo_original>
